<compile_context>
chip_gen: v6e
topology: v6e:2x2x1
jax: 0.10.0
libtpu: 0.0.40
codegen_flags: <defaults>
</compile_context>

<pallas_src>
import jax
import jax.numpy as jnp
import numpy as np
from jax.experimental import pallas as pl
from jax.experimental.pallas import tpu as pltpu


def _attention_kernel(g_ref, x_ref, wg_ref, wx_ref, b_ref, wpsi_ref, bpsi_ref,
                      o_ref):
    # g_ref: (1, F_g, TP) VMEM   x_ref: (1, F_l, TP) VMEM
    # wg_ref: (F_g, F_int) SMEM  wx_ref: (F_l, F_int) SMEM
    # b_ref: (F_int,) SMEM (= bg + bx folded)  wpsi_ref: (F_int,) SMEM
    # bpsi_ref: (1,) SMEM        o_ref: (1, F_l, TP) VMEM
    F_g = g_ref.shape[1]
    F_l = x_ref.shape[1]
    F_int = wg_ref.shape[1]
    TP = g_ref.shape[2]

    g = g_ref[0].astype(jnp.float32)   # (F_g, TP)
    x = x_ref[0].astype(jnp.float32)   # (F_l, TP)

    # psi = Sigmoid(Wpsi . ReLU(Wg.g + Wx.x + b) + bpsi)  — all on VPU/EUP.
    # Start the psi accumulator at bpsi (saves one broadcast-add at the end).
    psi = jnp.full((1, TP), bpsi_ref[0], jnp.float32)
    for j in range(F_int):
        acc = jnp.full((1, TP), b_ref[j], jnp.float32)
        for c in range(F_g):
            acc = acc + wg_ref[c, j] * g[c:c + 1, :]
        for c in range(F_l):
            acc = acc + wx_ref[c, j] * x[c:c + 1, :]
        acc = jnp.maximum(acc, 0.0)
        psi = psi + wpsi_ref[j] * acc
    psi = jax.nn.sigmoid(psi)          # (1, TP)

    # out = x * psi  (broadcast over channels / sublanes)
    o_ref[0] = (x * psi).astype(o_ref.dtype)


def _pick_pixel_tile(HW, channels):
    """Largest multiple-of-128 divisor of HW that keeps the double-buffered
    VMEM working set comfortably small (v7x has only 64 MiB VMEM); otherwise
    the full HW extent (block == full array dim is always legal)."""
    # ~3 arrays (g, x, out) x 2 buffers x channels x tp x 4 bytes  <= ~6 MiB
    budget = 6 << 20
    for cand in (8192, 4096, 2048, 1024, 512, 256, 128):
        if HW % cand == 0 and 3 * 2 * max(channels, 8) * cand * 4 <= budget:
            return cand
    return HW


def attention_block_pallas(g, x, params, *, tp=None):
    """g: (B, F_g, H, W), x: (B, F_l, H, W) in NCHW (PyTorch convention)."""
    B, Fg, H, W = g.shape
    Bx, Fl, Hx, Wx = x.shape
    assert (B, H, W) == (Bx, Hx, Wx)
    Fint = params["wg"].shape[1]
    HW = H * W

    if tp is None:
        tp = _pick_pixel_tile(HW, max(Fg, Fl))
    assert HW % tp == 0, "pixel dim must be divisible by the pixel tile"

    # NCHW -> (B, C, H*W): a free, contiguous reshape (no transpose / extra HBM pass)
    g3 = g.reshape(B, Fg, HW)
    x3 = x.reshape(B, Fl, HW)

    wg = params["wg"].astype(jnp.float32)                 # (Fg, Fint)
    wx = params["wx"].astype(jnp.float32)                 # (Fl, Fint)
    b_add = (params["bg"] + params["bx"]).astype(jnp.float32)   # (Fint,) fused bias
    wpsi = params["wpsi"].reshape(Fint).astype(jnp.float32)     # (Fint,)
    bpsi = params["bpsi"].reshape(1).astype(jnp.float32)        # (1,)

    smem = pl.BlockSpec(memory_space=pltpu.MemorySpace.SMEM)

    out3 = pl.pallas_call(
        _attention_kernel,
        out_shape=jax.ShapeDtypeStruct((B, Fl, HW), x.dtype),
        grid_spec=pltpu.PrefetchScalarGridSpec(
            num_scalar_prefetch=0,
            grid=(B, HW // tp),
            in_specs=[
                pl.BlockSpec((1, Fg, tp), lambda b, i: (b, 0, i)),
                pl.BlockSpec((1, Fl, tp), lambda b, i: (b, 0, i)),
                smem,   # wg
                smem,   # wx
                smem,   # b_add
                smem,   # wpsi
                smem,   # bpsi
            ],
            out_specs=pl.BlockSpec((1, Fl, tp), lambda b, i: (b, 0, i)),
        ),
        compiler_params=pltpu.CompilerParams(
            dimension_semantics=("parallel", "parallel")),
    )(g3, x3, wg, wx, b_add, wpsi, bpsi)

    # (B, Fl, HW) -> NCHW (free reshape)
    return out3.reshape(B, Fl, H, W)


def make_params(key, F_g, F_l, F_int, eps=1e-5):
    """Deterministic parameter init; BN (eval-mode, running stats 0/1) folded
    into the preceding 1x1-conv weight/bias."""
    ks = jax.random.split(key, 9)

    def conv_bn(kw, kb, kgamma, cin, cout):
        w = jax.random.normal(kw, (cin, cout), jnp.float32) * 0.1   # conv weight (1x1)
        b = jax.random.normal(kb, (cout,), jnp.float32) * 0.1       # conv bias
        gamma = 1.0 + 0.05 * jax.random.normal(kgamma, (cout,), jnp.float32)
        beta = 0.05 * jnp.arange(cout, dtype=jnp.float32)
        run_mean = jnp.zeros((cout,), jnp.float32)
        run_var = jnp.ones((cout,), jnp.float32)
        scale = gamma / jnp.sqrt(run_var + eps)
        w_eff = w * scale[None, :]
        b_eff = (b - run_mean) * scale + beta
        return w_eff, b_eff

    wg, bg = conv_bn(ks[0], ks[1], ks[2], F_g, F_int)
    wx, bx = conv_bn(ks[3], ks[4], ks[5], F_l, F_int)
    wpsi, bpsi = conv_bn(ks[6], ks[7], ks[8], F_int, 1)
    return {"wg": wg, "bg": bg, "wx": wx, "bx": bx, "wpsi": wpsi, "bpsi": bpsi}


def attention_block_ref(g, x, p):
    """Pure-JAX reference (same NCHW semantics as the PyTorch module, BN folded)."""
    B, Fg, H, W = g.shape
    _, Fl, _, _ = x.shape
    g2 = jnp.transpose(g, (0, 2, 3, 1)).reshape(-1, Fg)
    x2 = jnp.transpose(x, (0, 2, 3, 1)).reshape(-1, Fl)
    g1 = g2 @ p["wg"] + p["bg"]
    x1 = x2 @ p["wx"] + p["bx"]
    a = jnp.maximum(g1 + x1, 0.0)
    psi = jax.nn.sigmoid(a @ p["wpsi"] + p["bpsi"])
    out2 = x2 * psi
    return out2.reshape(B, H, W, Fl).transpose(0, 3, 1, 2)


if __name__ == "__main__":
    F_g, F_l, F_int = 4, 4, 8
    B, H, W = 2, 16, 16

    key = jax.random.PRNGKey(0)
    kg, kx, kp = jax.random.split(key, 3)
    g = jax.random.normal(kg, (B, F_g, H, W), jnp.float32)
    x = jax.random.normal(kx, (B, F_l, H, W), jnp.float32)
    params = make_params(kp, F_g, F_l, F_int)

    out = attention_block_pallas(g, x, params)
    out = jax.block_until_ready(out)

    ref = attention_block_ref(g, x, params)
    assert out.shape == (B, F_l, H, W)
    np.testing.assert_allclose(np.asarray(out), np.asarray(ref), rtol=1e-5, atol=1e-5)
    print("KERNEL_OK")
</pallas_src>

<mosaic_0001>
module attributes {stable_mosaic.version = 11 : i64} {
  func.func @_attention_kernel(%arg0: i32, %arg1: i32, %arg2: memref<1x4x256xf32, #tpu.memory_space<vmem>>, %arg3: memref<1x4x256xf32, #tpu.memory_space<vmem>>, %arg4: memref<4x8xf32, #tpu.memory_space<smem>>, %arg5: memref<4x8xf32, #tpu.memory_space<smem>>, %arg6: memref<8xf32, #tpu.memory_space<smem>>, %arg7: memref<8xf32, #tpu.memory_space<smem>>, %arg8: memref<1xf32, #tpu.memory_space<smem>>, %arg9: memref<1x4x256xf32, #tpu.memory_space<vmem>>) attributes {dimension_semantics = [#tpu.dimension_semantics<parallel>, #tpu.dimension_semantics<parallel>], iteration_bounds = array<i64: 2, 1>, scalar_prefetch = 0 : i64, scratch_operands = 0 : i64, tpu.core_type = #tpu.core_type<tc>, window_params = [{transform_indices = @transform_0, window_bounds = array<i64: 1, 4, 256>}, {transform_indices = @transform_1, window_bounds = array<i64: 1, 4, 256>}, {transform_indices = @transform_2, window_bounds = array<i64: 4, 8>}, {transform_indices = @transform_3, window_bounds = array<i64: 4, 8>}, {transform_indices = @transform_4, window_bounds = array<i64: 8>}, {transform_indices = @transform_5, window_bounds = array<i64: 8>}, {transform_indices = @transform_6, window_bounds = array<i64: 1>}, {transform_indices = @transform_7, window_bounds = array<i64: 1, 4, 256>}]} {
    %c0 = arith.constant 0 : index
    %c0_0 = arith.constant 0 : index
    %c0_1 = arith.constant 0 : index
    %0 = vector.load %arg2[%c0, %c0_0, %c0_1] : memref<1x4x256xf32, #tpu.memory_space<vmem>>, vector<1x4x256xf32>
    %1 = vector.shape_cast %0 : vector<1x4x256xf32> to vector<4x256xf32>
    %c0_2 = arith.constant 0 : index
    %c0_3 = arith.constant 0 : index
    %c0_4 = arith.constant 0 : index
    %2 = vector.load %arg3[%c0_2, %c0_3, %c0_4] : memref<1x4x256xf32, #tpu.memory_space<vmem>>, vector<1x4x256xf32>
    %3 = vector.shape_cast %2 : vector<1x4x256xf32> to vector<4x256xf32>
    %c0_5 = arith.constant 0 : index
    %4 = memref.load %arg8[%c0_5] : memref<1xf32, #tpu.memory_space<smem>>
    %5 = vector.broadcast %4 : f32 to vector<1x256xf32>
    %c0_6 = arith.constant 0 : index
    %6 = memref.load %arg6[%c0_6] : memref<8xf32, #tpu.memory_space<smem>>
    %7 = vector.broadcast %6 : f32 to vector<1x256xf32>
    %c0_7 = arith.constant 0 : index
    %c0_8 = arith.constant 0 : index
    %8 = memref.load %arg4[%c0_7, %c0_8] : memref<4x8xf32, #tpu.memory_space<smem>>
    %9 = vector.extract_strided_slice %1 {offsets = [0, 0], sizes = [1, 256], strides = [1, 1]} : vector<4x256xf32> to vector<1x256xf32>
    %10 = vector.broadcast %8 : f32 to vector<1x256xf32>
    %11 = arith.mulf %10, %9 : vector<1x256xf32>
    %12 = arith.addf %7, %11 : vector<1x256xf32>
    %c1 = arith.constant 1 : index
    %c0_9 = arith.constant 0 : index
    %13 = memref.load %arg4[%c1, %c0_9] : memref<4x8xf32, #tpu.memory_space<smem>>
    %14 = vector.extract_strided_slice %1 {offsets = [1, 0], sizes = [1, 256], strides = [1, 1]} : vector<4x256xf32> to vector<1x256xf32>
    %15 = vector.broadcast %13 : f32 to vector<1x256xf32>
    %16 = arith.mulf %15, %14 : vector<1x256xf32>
    %17 = arith.addf %12, %16 : vector<1x256xf32>
    %c2 = arith.constant 2 : index
    %c0_10 = arith.constant 0 : index
    %18 = memref.load %arg4[%c2, %c0_10] : memref<4x8xf32, #tpu.memory_space<smem>>
    %19 = vector.extract_strided_slice %1 {offsets = [2, 0], sizes = [1, 256], strides = [1, 1]} : vector<4x256xf32> to vector<1x256xf32>
    %20 = vector.broadcast %18 : f32 to vector<1x256xf32>
    %21 = arith.mulf %20, %19 : vector<1x256xf32>
    %22 = arith.addf %17, %21 : vector<1x256xf32>
    %c3 = arith.constant 3 : index
    %c0_11 = arith.constant 0 : index
    %23 = memref.load %arg4[%c3, %c0_11] : memref<4x8xf32, #tpu.memory_space<smem>>
    %24 = vector.extract_strided_slice %1 {offsets = [3, 0], sizes = [1, 256], strides = [1, 1]} : vector<4x256xf32> to vector<1x256xf32>
    %25 = vector.broadcast %23 : f32 to vector<1x256xf32>
    %26 = arith.mulf %25, %24 : vector<1x256xf32>
    %27 = arith.addf %22, %26 : vector<1x256xf32>
    %c0_12 = arith.constant 0 : index
    %c0_13 = arith.constant 0 : index
    %28 = memref.load %arg5[%c0_12, %c0_13] : memref<4x8xf32, #tpu.memory_space<smem>>
    %29 = vector.extract_strided_slice %3 {offsets = [0, 0], sizes = [1, 256], strides = [1, 1]} : vector<4x256xf32> to vector<1x256xf32>
    %30 = vector.broadcast %28 : f32 to vector<1x256xf32>
    %31 = arith.mulf %30, %29 : vector<1x256xf32>
    %32 = arith.addf %27, %31 : vector<1x256xf32>
    %c1_14 = arith.constant 1 : index
    %c0_15 = arith.constant 0 : index
    %33 = memref.load %arg5[%c1_14, %c0_15] : memref<4x8xf32, #tpu.memory_space<smem>>
    %34 = vector.extract_strided_slice %3 {offsets = [1, 0], sizes = [1, 256], strides = [1, 1]} : vector<4x256xf32> to vector<1x256xf32>
    %35 = vector.broadcast %33 : f32 to vector<1x256xf32>
    %36 = arith.mulf %35, %34 : vector<1x256xf32>
    %37 = arith.addf %32, %36 : vector<1x256xf32>
    %c2_16 = arith.constant 2 : index
    %c0_17 = arith.constant 0 : index
    %38 = memref.load %arg5[%c2_16, %c0_17] : memref<4x8xf32, #tpu.memory_space<smem>>
    %39 = vector.extract_strided_slice %3 {offsets = [2, 0], sizes = [1, 256], strides = [1, 1]} : vector<4x256xf32> to vector<1x256xf32>
    %40 = vector.broadcast %38 : f32 to vector<1x256xf32>
    %41 = arith.mulf %40, %39 : vector<1x256xf32>
    %42 = arith.addf %37, %41 : vector<1x256xf32>
    %c3_18 = arith.constant 3 : index
    %c0_19 = arith.constant 0 : index
    %43 = memref.load %arg5[%c3_18, %c0_19] : memref<4x8xf32, #tpu.memory_space<smem>>
    %44 = vector.extract_strided_slice %3 {offsets = [3, 0], sizes = [1, 256], strides = [1, 1]} : vector<4x256xf32> to vector<1x256xf32>
    %45 = vector.broadcast %43 : f32 to vector<1x256xf32>
    %46 = arith.mulf %45, %44 : vector<1x256xf32>
    %47 = arith.addf %42, %46 : vector<1x256xf32>
    %cst = arith.constant 0.000000e+00 : f32
    %48 = vector.broadcast %cst : f32 to vector<1x256xf32>
    %49 = arith.maximumf %47, %48 : vector<1x256xf32>
    %c0_20 = arith.constant 0 : index
    %50 = memref.load %arg7[%c0_20] : memref<8xf32, #tpu.memory_space<smem>>
    %51 = vector.broadcast %50 : f32 to vector<1x256xf32>
    %52 = arith.mulf %51, %49 : vector<1x256xf32>
    %53 = arith.addf %5, %52 : vector<1x256xf32>
    %c1_21 = arith.constant 1 : index
    %54 = memref.load %arg6[%c1_21] : memref<8xf32, #tpu.memory_space<smem>>
    %55 = vector.broadcast %54 : f32 to vector<1x256xf32>
    %c0_22 = arith.constant 0 : index
    %c1_23 = arith.constant 1 : index
    %56 = memref.load %arg4[%c0_22, %c1_23] : memref<4x8xf32, #tpu.memory_space<smem>>
    %57 = vector.extract_strided_slice %1 {offsets = [0, 0], sizes = [1, 256], strides = [1, 1]} : vector<4x256xf32> to vector<1x256xf32>
    %58 = vector.broadcast %56 : f32 to vector<1x256xf32>
    %59 = arith.mulf %58, %57 : vector<1x256xf32>
    %60 = arith.addf %55, %59 : vector<1x256xf32>
    %c1_24 = arith.constant 1 : index
    %c1_25 = arith.constant 1 : index
    %61 = memref.load %arg4[%c1_24, %c1_25] : memref<4x8xf32, #tpu.memory_space<smem>>
    %62 = vector.extract_strided_slice %1 {offsets = [1, 0], sizes = [1, 256], strides = [1, 1]} : vector<4x256xf32> to vector<1x256xf32>
    %63 = vector.broadcast %61 : f32 to vector<1x256xf32>
    %64 = arith.mulf %63, %62 : vector<1x256xf32>
    %65 = arith.addf %60, %64 : vector<1x256xf32>
    %c2_26 = arith.constant 2 : index
    %c1_27 = arith.constant 1 : index
    %66 = memref.load %arg4[%c2_26, %c1_27] : memref<4x8xf32, #tpu.memory_space<smem>>
    %67 = vector.extract_strided_slice %1 {offsets = [2, 0], sizes = [1, 256], strides = [1, 1]} : vector<4x256xf32> to vector<1x256xf32>
    %68 = vector.broadcast %66 : f32 to vector<1x256xf32>
    %69 = arith.mulf %68, %67 : vector<1x256xf32>
    %70 = arith.addf %65, %69 : vector<1x256xf32>
    %c3_28 = arith.constant 3 : index
    %c1_29 = arith.constant 1 : index
    %71 = memref.load %arg4[%c3_28, %c1_29] : memref<4x8xf32, #tpu.memory_space<smem>>
    %72 = vector.extract_strided_slice %1 {offsets = [3, 0], sizes = [1, 256], strides = [1, 1]} : vector<4x256xf32> to vector<1x256xf32>
    %73 = vector.broadcast %71 : f32 to vector<1x256xf32>
    %74 = arith.mulf %73, %72 : vector<1x256xf32>
    %75 = arith.addf %70, %74 : vector<1x256xf32>
    %c0_30 = arith.constant 0 : index
    %c1_31 = arith.constant 1 : index
    %76 = memref.load %arg5[%c0_30, %c1_31] : memref<4x8xf32, #tpu.memory_space<smem>>
    %77 = vector.extract_strided_slice %3 {offsets = [0, 0], sizes = [1, 256], strides = [1, 1]} : vector<4x256xf32> to vector<1x256xf32>
    %78 = vector.broadcast %76 : f32 to vector<1x256xf32>
    %79 = arith.mulf %78, %77 : vector<1x256xf32>
    %80 = arith.addf %75, %79 : vector<1x256xf32>
    %c1_32 = arith.constant 1 : index
    %c1_33 = arith.constant 1 : index
    %81 = memref.load %arg5[%c1_32, %c1_33] : memref<4x8xf32, #tpu.memory_space<smem>>
    %82 = vector.extract_strided_slice %3 {offsets = [1, 0], sizes = [1, 256], strides = [1, 1]} : vector<4x256xf32> to vector<1x256xf32>
    %83 = vector.broadcast %81 : f32 to vector<1x256xf32>
    %84 = arith.mulf %83, %82 : vector<1x256xf32>
    %85 = arith.addf %80, %84 : vector<1x256xf32>
    %c2_34 = arith.constant 2 : index
    %c1_35 = arith.constant 1 : index
    %86 = memref.load %arg5[%c2_34, %c1_35] : memref<4x8xf32, #tpu.memory_space<smem>>
    %87 = vector.extract_strided_slice %3 {offsets = [2, 0], sizes = [1, 256], strides = [1, 1]} : vector<4x256xf32> to vector<1x256xf32>
    %88 = vector.broadcast %86 : f32 to vector<1x256xf32>
    %89 = arith.mulf %88, %87 : vector<1x256xf32>
    %90 = arith.addf %85, %89 : vector<1x256xf32>
    %c3_36 = arith.constant 3 : index
    %c1_37 = arith.constant 1 : index
    %91 = memref.load %arg5[%c3_36, %c1_37] : memref<4x8xf32, #tpu.memory_space<smem>>
    %92 = vector.extract_strided_slice %3 {offsets = [3, 0], sizes = [1, 256], strides = [1, 1]} : vector<4x256xf32> to vector<1x256xf32>
    %93 = vector.broadcast %91 : f32 to vector<1x256xf32>
    %94 = arith.mulf %93, %92 : vector<1x256xf32>
    %95 = arith.addf %90, %94 : vector<1x256xf32>
    %cst_38 = arith.constant 0.000000e+00 : f32
    %96 = vector.broadcast %cst_38 : f32 to vector<1x256xf32>
    %97 = arith.maximumf %95, %96 : vector<1x256xf32>
    %c1_39 = arith.constant 1 : index
    %98 = memref.load %arg7[%c1_39] : memref<8xf32, #tpu.memory_space<smem>>
    %99 = vector.broadcast %98 : f32 to vector<1x256xf32>
    %100 = arith.mulf %99, %97 : vector<1x256xf32>
    %101 = arith.addf %53, %100 : vector<1x256xf32>
    %c2_40 = arith.constant 2 : index
    %102 = memref.load %arg6[%c2_40] : memref<8xf32, #tpu.memory_space<smem>>
    %103 = vector.broadcast %102 : f32 to vector<1x256xf32>
    %c0_41 = arith.constant 0 : index
    %c2_42 = arith.constant 2 : index
    %104 = memref.load %arg4[%c0_41, %c2_42] : memref<4x8xf32, #tpu.memory_space<smem>>
    %105 = vector.extract_strided_slice %1 {offsets = [0, 0], sizes = [1, 256], strides = [1, 1]} : vector<4x256xf32> to vector<1x256xf32>
    %106 = vector.broadcast %104 : f32 to vector<1x256xf32>
    %107 = arith.mulf %106, %105 : vector<1x256xf32>
    %108 = arith.addf %103, %107 : vector<1x256xf32>
    %c1_43 = arith.constant 1 : index
    %c2_44 = arith.constant 2 : index
    %109 = memref.load %arg4[%c1_43, %c2_44] : memref<4x8xf32, #tpu.memory_space<smem>>
    %110 = vector.extract_strided_slice %1 {offsets = [1, 0], sizes = [1, 256], strides = [1, 1]} : vector<4x256xf32> to vector<1x256xf32>
    %111 = vector.broadcast %109 : f32 to vector<1x256xf32>
    %112 = arith.mulf %111, %110 : vector<1x256xf32>
    %113 = arith.addf %108, %112 : vector<1x256xf32>
    %c2_45 = arith.constant 2 : index
    %c2_46 = arith.constant 2 : index
    %114 = memref.load %arg4[%c2_45, %c2_46] : memref<4x8xf32, #tpu.memory_space<smem>>
    %115 = vector.extract_strided_slice %1 {offsets = [2, 0], sizes = [1, 256], strides = [1, 1]} : vector<4x256xf32> to vector<1x256xf32>
    %116 = vector.broadcast %114 : f32 to vector<1x256xf32>
    %117 = arith.mulf %116, %115 : vector<1x256xf32>
    %118 = arith.addf %113, %117 : vector<1x256xf32>
    %c3_47 = arith.constant 3 : index
    %c2_48 = arith.constant 2 : index
    %119 = memref.load %arg4[%c3_47, %c2_48] : memref<4x8xf32, #tpu.memory_space<smem>>
    %120 = vector.extract_strided_slice %1 {offsets = [3, 0], sizes = [1, 256], strides = [1, 1]} : vector<4x256xf32> to vector<1x256xf32>
    %121 = vector.broadcast %119 : f32 to vector<1x256xf32>
    %122 = arith.mulf %121, %120 : vector<1x256xf32>
    %123 = arith.addf %118, %122 : vector<1x256xf32>
    %c0_49 = arith.constant 0 : index
    %c2_50 = arith.constant 2 : index
    %124 = memref.load %arg5[%c0_49, %c2_50] : memref<4x8xf32, #tpu.memory_space<smem>>
    %125 = vector.extract_strided_slice %3 {offsets = [0, 0], sizes = [1, 256], strides = [1, 1]} : vector<4x256xf32> to vector<1x256xf32>
    %126 = vector.broadcast %124 : f32 to vector<1x256xf32>
    %127 = arith.mulf %126, %125 : vector<1x256xf32>
    %128 = arith.addf %123, %127 : vector<1x256xf32>
    %c1_51 = arith.constant 1 : index
    %c2_52 = arith.constant 2 : index
    %129 = memref.load %arg5[%c1_51, %c2_52] : memref<4x8xf32, #tpu.memory_space<smem>>
    %130 = vector.extract_strided_slice %3 {offsets = [1, 0], sizes = [1, 256], strides = [1, 1]} : vector<4x256xf32> to vector<1x256xf32>
    %131 = vector.broadcast %129 : f32 to vector<1x256xf32>
    %132 = arith.mulf %131, %130 : vector<1x256xf32>
    %133 = arith.addf %128, %132 : vector<1x256xf32>
    %c2_53 = arith.constant 2 : index
    %c2_54 = arith.constant 2 : index
    %134 = memref.load %arg5[%c2_53, %c2_54] : memref<4x8xf32, #tpu.memory_space<smem>>
    %135 = vector.extract_strided_slice %3 {offsets = [2, 0], sizes = [1, 256], strides = [1, 1]} : vector<4x256xf32> to vector<1x256xf32>
    %136 = vector.broadcast %134 : f32 to vector<1x256xf32>
    %137 = arith.mulf %136, %135 : vector<1x256xf32>
    %138 = arith.addf %133, %137 : vector<1x256xf32>
    %c3_55 = arith.constant 3 : index
    %c2_56 = arith.constant 2 : index
    %139 = memref.load %arg5[%c3_55, %c2_56] : memref<4x8xf32, #tpu.memory_space<smem>>
    %140 = vector.extract_strided_slice %3 {offsets = [3, 0], sizes = [1, 256], strides = [1, 1]} : vector<4x256xf32> to vector<1x256xf32>
    %141 = vector.broadcast %139 : f32 to vector<1x256xf32>
    %142 = arith.mulf %141, %140 : vector<1x256xf32>
    %143 = arith.addf %138, %142 : vector<1x256xf32>
    %cst_57 = arith.constant 0.000000e+00 : f32
    %144 = vector.broadcast %cst_57 : f32 to vector<1x256xf32>
    %145 = arith.maximumf %143, %144 : vector<1x256xf32>
    %c2_58 = arith.constant 2 : index
    %146 = memref.load %arg7[%c2_58] : memref<8xf32, #tpu.memory_space<smem>>
    %147 = vector.broadcast %146 : f32 to vector<1x256xf32>
    %148 = arith.mulf %147, %145 : vector<1x256xf32>
    %149 = arith.addf %101, %148 : vector<1x256xf32>
    %c3_59 = arith.constant 3 : index
    %150 = memref.load %arg6[%c3_59] : memref<8xf32, #tpu.memory_space<smem>>
    %151 = vector.broadcast %150 : f32 to vector<1x256xf32>
    %c0_60 = arith.constant 0 : index
    %c3_61 = arith.constant 3 : index
    %152 = memref.load %arg4[%c0_60, %c3_61] : memref<4x8xf32, #tpu.memory_space<smem>>
    %153 = vector.extract_strided_slice %1 {offsets = [0, 0], sizes = [1, 256], strides = [1, 1]} : vector<4x256xf32> to vector<1x256xf32>
    %154 = vector.broadcast %152 : f32 to vector<1x256xf32>
    %155 = arith.mulf %154, %153 : vector<1x256xf32>
    %156 = arith.addf %151, %155 : vector<1x256xf32>
    %c1_62 = arith.constant 1 : index
    %c3_63 = arith.constant 3 : index
    %157 = memref.load %arg4[%c1_62, %c3_63] : memref<4x8xf32, #tpu.memory_space<smem>>
    %158 = vector.extract_strided_slice %1 {offsets = [1, 0], sizes = [1, 256], strides = [1, 1]} : vector<4x256xf32> to vector<1x256xf32>
    %159 = vector.broadcast %157 : f32 to vector<1x256xf32>
    %160 = arith.mulf %159, %158 : vector<1x256xf32>
    %161 = arith.addf %156, %160 : vector<1x256xf32>
    %c2_64 = arith.constant 2 : index
    %c3_65 = arith.constant 3 : index
    %162 = memref.load %arg4[%c2_64, %c3_65] : memref<4x8xf32, #tpu.memory_space<smem>>
    %163 = vector.extract_strided_slice %1 {offsets = [2, 0], sizes = [1, 256], strides = [1, 1]} : vector<4x256xf32> to vector<1x256xf32>
    %164 = vector.broadcast %162 : f32 to vector<1x256xf32>
    %165 = arith.mulf %164, %163 : vector<1x256xf32>
    %166 = arith.addf %161, %165 : vector<1x256xf32>
    %c3_66 = arith.constant 3 : index
    %c3_67 = arith.constant 3 : index
    %167 = memref.load %arg4[%c3_66, %c3_67] : memref<4x8xf32, #tpu.memory_space<smem>>
    %168 = vector.extract_strided_slice %1 {offsets = [3, 0], sizes = [1, 256], strides = [1, 1]} : vector<4x256xf32> to vector<1x256xf32>
    %169 = vector.broadcast %167 : f32 to vector<1x256xf32>
    %170 = arith.mulf %169, %168 : vector<1x256xf32>
    %171 = arith.addf %166, %170 : vector<1x256xf32>
    %c0_68 = arith.constant 0 : index
    %c3_69 = arith.constant 3 : index
    %172 = memref.load %arg5[%c0_68, %c3_69] : memref<4x8xf32, #tpu.memory_space<smem>>
    %173 = vector.extract_strided_slice %3 {offsets = [0, 0], sizes = [1, 256], strides = [1, 1]} : vector<4x256xf32> to vector<1x256xf32>
    %174 = vector.broadcast %172 : f32 to vector<1x256xf32>
    %175 = arith.mulf %174, %173 : vector<1x256xf32>
    %176 = arith.addf %171, %175 : vector<1x256xf32>
    %c1_70 = arith.constant 1 : index
    %c3_71 = arith.constant 3 : index
    %177 = memref.load %arg5[%c1_70, %c3_71] : memref<4x8xf32, #tpu.memory_space<smem>>
    %178 = vector.extract_strided_slice %3 {offsets = [1, 0], sizes = [1, 256], strides = [1, 1]} : vector<4x256xf32> to vector<1x256xf32>
    %179 = vector.broadcast %177 : f32 to vector<1x256xf32>
    %180 = arith.mulf %179, %178 : vector<1x256xf32>
    %181 = arith.addf %176, %180 : vector<1x256xf32>
    %c2_72 = arith.constant 2 : index
    %c3_73 = arith.constant 3 : index
    %182 = memref.load %arg5[%c2_72, %c3_73] : memref<4x8xf32, #tpu.memory_space<smem>>
    %183 = vector.extract_strided_slice %3 {offsets = [2, 0], sizes = [1, 256], strides = [1, 1]} : vector<4x256xf32> to vector<1x256xf32>
    %184 = vector.broadcast %182 : f32 to vector<1x256xf32>
    %185 = arith.mulf %184, %183 : vector<1x256xf32>
    %186 = arith.addf %181, %185 : vector<1x256xf32>
    %c3_74 = arith.constant 3 : index
    %c3_75 = arith.constant 3 : index
    %187 = memref.load %arg5[%c3_74, %c3_75] : memref<4x8xf32, #tpu.memory_space<smem>>
    %188 = vector.extract_strided_slice %3 {offsets = [3, 0], sizes = [1, 256], strides = [1, 1]} : vector<4x256xf32> to vector<1x256xf32>
    %189 = vector.broadcast %187 : f32 to vector<1x256xf32>
    %190 = arith.mulf %189, %188 : vector<1x256xf32>
    %191 = arith.addf %186, %190 : vector<1x256xf32>
    %cst_76 = arith.constant 0.000000e+00 : f32
    %192 = vector.broadcast %cst_76 : f32 to vector<1x256xf32>
    %193 = arith.maximumf %191, %192 : vector<1x256xf32>
    %c3_77 = arith.constant 3 : index
    %194 = memref.load %arg7[%c3_77] : memref<8xf32, #tpu.memory_space<smem>>
    %195 = vector.broadcast %194 : f32 to vector<1x256xf32>
    %196 = arith.mulf %195, %193 : vector<1x256xf32>
    %197 = arith.addf %149, %196 : vector<1x256xf32>
    %c4 = arith.constant 4 : index
    %198 = memref.load %arg6[%c4] : memref<8xf32, #tpu.memory_space<smem>>
    %199 = vector.broadcast %198 : f32 to vector<1x256xf32>
    %c0_78 = arith.constant 0 : index
    %c4_79 = arith.constant 4 : index
    %200 = memref.load %arg4[%c0_78, %c4_79] : memref<4x8xf32, #tpu.memory_space<smem>>
    %201 = vector.extract_strided_slice %1 {offsets = [0, 0], sizes = [1, 256], strides = [1, 1]} : vector<4x256xf32> to vector<1x256xf32>
    %202 = vector.broadcast %200 : f32 to vector<1x256xf32>
    %203 = arith.mulf %202, %201 : vector<1x256xf32>
    %204 = arith.addf %199, %203 : vector<1x256xf32>
    %c1_80 = arith.constant 1 : index
    %c4_81 = arith.constant 4 : index
    %205 = memref.load %arg4[%c1_80, %c4_81] : memref<4x8xf32, #tpu.memory_space<smem>>
    %206 = vector.extract_strided_slice %1 {offsets = [1, 0], sizes = [1, 256], strides = [1, 1]} : vector<4x256xf32> to vector<1x256xf32>
    %207 = vector.broadcast %205 : f32 to vector<1x256xf32>
    %208 = arith.mulf %207, %206 : vector<1x256xf32>
    %209 = arith.addf %204, %208 : vector<1x256xf32>
    %c2_82 = arith.constant 2 : index
    %c4_83 = arith.constant 4 : index
    %210 = memref.load %arg4[%c2_82, %c4_83] : memref<4x8xf32, #tpu.memory_space<smem>>
    %211 = vector.extract_strided_slice %1 {offsets = [2, 0], sizes = [1, 256], strides = [1, 1]} : vector<4x256xf32> to vector<1x256xf32>
    %212 = vector.broadcast %210 : f32 to vector<1x256xf32>
    %213 = arith.mulf %212, %211 : vector<1x256xf32>
    %214 = arith.addf %209, %213 : vector<1x256xf32>
    %c3_84 = arith.constant 3 : index
    %c4_85 = arith.constant 4 : index
    %215 = memref.load %arg4[%c3_84, %c4_85] : memref<4x8xf32, #tpu.memory_space<smem>>
    %216 = vector.extract_strided_slice %1 {offsets = [3, 0], sizes = [1, 256], strides = [1, 1]} : vector<4x256xf32> to vector<1x256xf32>
    %217 = vector.broadcast %215 : f32 to vector<1x256xf32>
    %218 = arith.mulf %217, %216 : vector<1x256xf32>
    %219 = arith.addf %214, %218 : vector<1x256xf32>
    %c0_86 = arith.constant 0 : index
    %c4_87 = arith.constant 4 : index
    %220 = memref.load %arg5[%c0_86, %c4_87] : memref<4x8xf32, #tpu.memory_space<smem>>
    %221 = vector.extract_strided_slice %3 {offsets = [0, 0], sizes = [1, 256], strides = [1, 1]} : vector<4x256xf32> to vector<1x256xf32>
    %222 = vector.broadcast %220 : f32 to vector<1x256xf32>
    %223 = arith.mulf %222, %221 : vector<1x256xf32>
    %224 = arith.addf %219, %223 : vector<1x256xf32>
    %c1_88 = arith.constant 1 : index
    %c4_89 = arith.constant 4 : index
    %225 = memref.load %arg5[%c1_88, %c4_89] : memref<4x8xf32, #tpu.memory_space<smem>>
    %226 = vector.extract_strided_slice %3 {offsets = [1, 0], sizes = [1, 256], strides = [1, 1]} : vector<4x256xf32> to vector<1x256xf32>
    %227 = vector.broadcast %225 : f32 to vector<1x256xf32>
    %228 = arith.mulf %227, %226 : vector<1x256xf32>
    %229 = arith.addf %224, %228 : vector<1x256xf32>
    %c2_90 = arith.constant 2 : index
    %c4_91 = arith.constant 4 : index
    %230 = memref.load %arg5[%c2_90, %c4_91] : memref<4x8xf32, #tpu.memory_space<smem>>
    %231 = vector.extract_strided_slice %3 {offsets = [2, 0], sizes = [1, 256], strides = [1, 1]} : vector<4x256xf32> to vector<1x256xf32>
    %232 = vector.broadcast %230 : f32 to vector<1x256xf32>
    %233 = arith.mulf %232, %231 : vector<1x256xf32>
    %234 = arith.addf %229, %233 : vector<1x256xf32>
    %c3_92 = arith.constant 3 : index
    %c4_93 = arith.constant 4 : index
    %235 = memref.load %arg5[%c3_92, %c4_93] : memref<4x8xf32, #tpu.memory_space<smem>>
    %236 = vector.extract_strided_slice %3 {offsets = [3, 0], sizes = [1, 256], strides = [1, 1]} : vector<4x256xf32> to vector<1x256xf32>
    %237 = vector.broadcast %235 : f32 to vector<1x256xf32>
    %238 = arith.mulf %237, %236 : vector<1x256xf32>
    %239 = arith.addf %234, %238 : vector<1x256xf32>
    %cst_94 = arith.constant 0.000000e+00 : f32
    %240 = vector.broadcast %cst_94 : f32 to vector<1x256xf32>
    %241 = arith.maximumf %239, %240 : vector<1x256xf32>
    %c4_95 = arith.constant 4 : index
    %242 = memref.load %arg7[%c4_95] : memref<8xf32, #tpu.memory_space<smem>>
    %243 = vector.broadcast %242 : f32 to vector<1x256xf32>
    %244 = arith.mulf %243, %241 : vector<1x256xf32>
    %245 = arith.addf %197, %244 : vector<1x256xf32>
    %c5 = arith.constant 5 : index
    %246 = memref.load %arg6[%c5] : memref<8xf32, #tpu.memory_space<smem>>
    %247 = vector.broadcast %246 : f32 to vector<1x256xf32>
    %c0_96 = arith.constant 0 : index
    %c5_97 = arith.constant 5 : index
    %248 = memref.load %arg4[%c0_96, %c5_97] : memref<4x8xf32, #tpu.memory_space<smem>>
    %249 = vector.extract_strided_slice %1 {offsets = [0, 0], sizes = [1, 256], strides = [1, 1]} : vector<4x256xf32> to vector<1x256xf32>
    %250 = vector.broadcast %248 : f32 to vector<1x256xf32>
    %251 = arith.mulf %250, %249 : vector<1x256xf32>
    %252 = arith.addf %247, %251 : vector<1x256xf32>
    %c1_98 = arith.constant 1 : index
    %c5_99 = arith.constant 5 : index
    %253 = memref.load %arg4[%c1_98, %c5_99] : memref<4x8xf32, #tpu.memory_space<smem>>
    %254 = vector.extract_strided_slice %1 {offsets = [1, 0], sizes = [1, 256], strides = [1, 1]} : vector<4x256xf32> to vector<1x256xf32>
    %255 = vector.broadcast %253 : f32 to vector<1x256xf32>
    %256 = arith.mulf %255, %254 : vector<1x256xf32>
    %257 = arith.addf %252, %256 : vector<1x256xf32>
    %c2_100 = arith.constant 2 : index
    %c5_101 = arith.constant 5 : index
    %258 = memref.load %arg4[%c2_100, %c5_101] : memref<4x8xf32, #tpu.memory_space<smem>>
    %259 = vector.extract_strided_slice %1 {offsets = [2, 0], sizes = [1, 256], strides = [1, 1]} : vector<4x256xf32> to vector<1x256xf32>
    %260 = vector.broadcast %258 : f32 to vector<1x256xf32>
    %261 = arith.mulf %260, %259 : vector<1x256xf32>
    %262 = arith.addf %257, %261 : vector<1x256xf32>
    %c3_102 = arith.constant 3 : index
    %c5_103 = arith.constant 5 : index
    %263 = memref.load %arg4[%c3_102, %c5_103] : memref<4x8xf32, #tpu.memory_space<smem>>
    %264 = vector.extract_strided_slice %1 {offsets = [3, 0], sizes = [1, 256], strides = [1, 1]} : vector<4x256xf32> to vector<1x256xf32>
    %265 = vector.broadcast %263 : f32 to vector<1x256xf32>
    %266 = arith.mulf %265, %264 : vector<1x256xf32>
    %267 = arith.addf %262, %266 : vector<1x256xf32>
    %c0_104 = arith.constant 0 : index
    %c5_105 = arith.constant 5 : index
    %268 = memref.load %arg5[%c0_104, %c5_105] : memref<4x8xf32, #tpu.memory_space<smem>>
    %269 = vector.extract_strided_slice %3 {offsets = [0, 0], sizes = [1, 256], strides = [1, 1]} : vector<4x256xf32> to vector<1x256xf32>
    %270 = vector.broadcast %268 : f32 to vector<1x256xf32>
    %271 = arith.mulf %270, %269 : vector<1x256xf32>
    %272 = arith.addf %267, %271 : vector<1x256xf32>
    %c1_106 = arith.constant 1 : index
    %c5_107 = arith.constant 5 : index
    %273 = memref.load %arg5[%c1_106, %c5_107] : memref<4x8xf32, #tpu.memory_space<smem>>
    %274 = vector.extract_strided_slice %3 {offsets = [1, 0], sizes = [1, 256], strides = [1, 1]} : vector<4x256xf32> to vector<1x256xf32>
    %275 = vector.broadcast %273 : f32 to vector<1x256xf32>
    %276 = arith.mulf %275, %274 : vector<1x256xf32>
    %277 = arith.addf %272, %276 : vector<1x256xf32>
    %c2_108 = arith.constant 2 : index
    %c5_109 = arith.constant 5 : index
    %278 = memref.load %arg5[%c2_108, %c5_109] : memref<4x8xf32, #tpu.memory_space<smem>>
    %279 = vector.extract_strided_slice %3 {offsets = [2, 0], sizes = [1, 256], strides = [1, 1]} : vector<4x256xf32> to vector<1x256xf32>
    %280 = vector.broadcast %278 : f32 to vector<1x256xf32>
    %281 = arith.mulf %280, %279 : vector<1x256xf32>
    %282 = arith.addf %277, %281 : vector<1x256xf32>
    %c3_110 = arith.constant 3 : index
    %c5_111 = arith.constant 5 : index
    %283 = memref.load %arg5[%c3_110, %c5_111] : memref<4x8xf32, #tpu.memory_space<smem>>
    %284 = vector.extract_strided_slice %3 {offsets = [3, 0], sizes = [1, 256], strides = [1, 1]} : vector<4x256xf32> to vector<1x256xf32>
    %285 = vector.broadcast %283 : f32 to vector<1x256xf32>
    %286 = arith.mulf %285, %284 : vector<1x256xf32>
    %287 = arith.addf %282, %286 : vector<1x256xf32>
    %cst_112 = arith.constant 0.000000e+00 : f32
    %288 = vector.broadcast %cst_112 : f32 to vector<1x256xf32>
    %289 = arith.maximumf %287, %288 : vector<1x256xf32>
    %c5_113 = arith.constant 5 : index
    %290 = memref.load %arg7[%c5_113] : memref<8xf32, #tpu.memory_space<smem>>
    %291 = vector.broadcast %290 : f32 to vector<1x256xf32>
    %292 = arith.mulf %291, %289 : vector<1x256xf32>
    %293 = arith.addf %245, %292 : vector<1x256xf32>
    %c6 = arith.constant 6 : index
    %294 = memref.load %arg6[%c6] : memref<8xf32, #tpu.memory_space<smem>>
    %295 = vector.broadcast %294 : f32 to vector<1x256xf32>
    %c0_114 = arith.constant 0 : index
    %c6_115 = arith.constant 6 : index
    %296 = memref.load %arg4[%c0_114, %c6_115] : memref<4x8xf32, #tpu.memory_space<smem>>
    %297 = vector.extract_strided_slice %1 {offsets = [0, 0], sizes = [1, 256], strides = [1, 1]} : vector<4x256xf32> to vector<1x256xf32>
    %298 = vector.broadcast %296 : f32 to vector<1x256xf32>
    %299 = arith.mulf %298, %297 : vector<1x256xf32>
    %300 = arith.addf %295, %299 : vector<1x256xf32>
    %c1_116 = arith.constant 1 : index
    %c6_117 = arith.constant 6 : index
    %301 = memref.load %arg4[%c1_116, %c6_117] : memref<4x8xf32, #tpu.memory_space<smem>>
    %302 = vector.extract_strided_slice %1 {offsets = [1, 0], sizes = [1, 256], strides = [1, 1]} : vector<4x256xf32> to vector<1x256xf32>
    %303 = vector.broadcast %301 : f32 to vector<1x256xf32>
    %304 = arith.mulf %303, %302 : vector<1x256xf32>
    %305 = arith.addf %300, %304 : vector<1x256xf32>
    %c2_118 = arith.constant 2 : index
    %c6_119 = arith.constant 6 : index
    %306 = memref.load %arg4[%c2_118, %c6_119] : memref<4x8xf32, #tpu.memory_space<smem>>
    %307 = vector.extract_strided_slice %1 {offsets = [2, 0], sizes = [1, 256], strides = [1, 1]} : vector<4x256xf32> to vector<1x256xf32>
    %308 = vector.broadcast %306 : f32 to vector<1x256xf32>
    %309 = arith.mulf %308, %307 : vector<1x256xf32>
    %310 = arith.addf %305, %309 : vector<1x256xf32>
    %c3_120 = arith.constant 3 : index
    %c6_121 = arith.constant 6 : index
    %311 = memref.load %arg4[%c3_120, %c6_121] : memref<4x8xf32, #tpu.memory_space<smem>>
    %312 = vector.extract_strided_slice %1 {offsets = [3, 0], sizes = [1, 256], strides = [1, 1]} : vector<4x256xf32> to vector<1x256xf32>
    %313 = vector.broadcast %311 : f32 to vector<1x256xf32>
    %314 = arith.mulf %313, %312 : vector<1x256xf32>
    %315 = arith.addf %310, %314 : vector<1x256xf32>
    %c0_122 = arith.constant 0 : index
    %c6_123 = arith.constant 6 : index
    %316 = memref.load %arg5[%c0_122, %c6_123] : memref<4x8xf32, #tpu.memory_space<smem>>
    %317 = vector.extract_strided_slice %3 {offsets = [0, 0], sizes = [1, 256], strides = [1, 1]} : vector<4x256xf32> to vector<1x256xf32>
    %318 = vector.broadcast %316 : f32 to vector<1x256xf32>
    %319 = arith.mulf %318, %317 : vector<1x256xf32>
    %320 = arith.addf %315, %319 : vector<1x256xf32>
    %c1_124 = arith.constant 1 : index
    %c6_125 = arith.constant 6 : index
    %321 = memref.load %arg5[%c1_124, %c6_125] : memref<4x8xf32, #tpu.memory_space<smem>>
    %322 = vector.extract_strided_slice %3 {offsets = [1, 0], sizes = [1, 256], strides = [1, 1]} : vector<4x256xf32> to vector<1x256xf32>
    %323 = vector.broadcast %321 : f32 to vector<1x256xf32>
    %324 = arith.mulf %323, %322 : vector<1x256xf32>
    %325 = arith.addf %320, %324 : vector<1x256xf32>
    %c2_126 = arith.constant 2 : index
    %c6_127 = arith.constant 6 : index
    %326 = memref.load %arg5[%c2_126, %c6_127] : memref<4x8xf32, #tpu.memory_space<smem>>
    %327 = vector.extract_strided_slice %3 {offsets = [2, 0], sizes = [1, 256], strides = [1, 1]} : vector<4x256xf32> to vector<1x256xf32>
    %328 = vector.broadcast %326 : f32 to vector<1x256xf32>
    %329 = arith.mulf %328, %327 : vector<1x256xf32>
    %330 = arith.addf %325, %329 : vector<1x256xf32>
    %c3_128 = arith.constant 3 : index
    %c6_129 = arith.constant 6 : index
    %331 = memref.load %arg5[%c3_128, %c6_129] : memref<4x8xf32, #tpu.memory_space<smem>>
    %332 = vector.extract_strided_slice %3 {offsets = [3, 0], sizes = [1, 256], strides = [1, 1]} : vector<4x256xf32> to vector<1x256xf32>
    %333 = vector.broadcast %331 : f32 to vector<1x256xf32>
    %334 = arith.mulf %333, %332 : vector<1x256xf32>
    %335 = arith.addf %330, %334 : vector<1x256xf32>
    %cst_130 = arith.constant 0.000000e+00 : f32
    %336 = vector.broadcast %cst_130 : f32 to vector<1x256xf32>
    %337 = arith.maximumf %335, %336 : vector<1x256xf32>
    %c6_131 = arith.constant 6 : index
    %338 = memref.load %arg7[%c6_131] : memref<8xf32, #tpu.memory_space<smem>>
    %339 = vector.broadcast %338 : f32 to vector<1x256xf32>
    %340 = arith.mulf %339, %337 : vector<1x256xf32>
    %341 = arith.addf %293, %340 : vector<1x256xf32>
    %c7 = arith.constant 7 : index
    %342 = memref.load %arg6[%c7] : memref<8xf32, #tpu.memory_space<smem>>
    %343 = vector.broadcast %342 : f32 to vector<1x256xf32>
    %c0_132 = arith.constant 0 : index
    %c7_133 = arith.constant 7 : index
    %344 = memref.load %arg4[%c0_132, %c7_133] : memref<4x8xf32, #tpu.memory_space<smem>>
    %345 = vector.extract_strided_slice %1 {offsets = [0, 0], sizes = [1, 256], strides = [1, 1]} : vector<4x256xf32> to vector<1x256xf32>
    %346 = vector.broadcast %344 : f32 to vector<1x256xf32>
    %347 = arith.mulf %346, %345 : vector<1x256xf32>
    %348 = arith.addf %343, %347 : vector<1x256xf32>
    %c1_134 = arith.constant 1 : index
    %c7_135 = arith.constant 7 : index
    %349 = memref.load %arg4[%c1_134, %c7_135] : memref<4x8xf32, #tpu.memory_space<smem>>
    %350 = vector.extract_strided_slice %1 {offsets = [1, 0], sizes = [1, 256], strides = [1, 1]} : vector<4x256xf32> to vector<1x256xf32>
    %351 = vector.broadcast %349 : f32 to vector<1x256xf32>
    %352 = arith.mulf %351, %350 : vector<1x256xf32>
    %353 = arith.addf %348, %352 : vector<1x256xf32>
    %c2_136 = arith.constant 2 : index
    %c7_137 = arith.constant 7 : index
    %354 = memref.load %arg4[%c2_136, %c7_137] : memref<4x8xf32, #tpu.memory_space<smem>>
    %355 = vector.extract_strided_slice %1 {offsets = [2, 0], sizes = [1, 256], strides = [1, 1]} : vector<4x256xf32> to vector<1x256xf32>
    %356 = vector.broadcast %354 : f32 to vector<1x256xf32>
    %357 = arith.mulf %356, %355 : vector<1x256xf32>
    %358 = arith.addf %353, %357 : vector<1x256xf32>
    %c3_138 = arith.constant 3 : index
    %c7_139 = arith.constant 7 : index
    %359 = memref.load %arg4[%c3_138, %c7_139] : memref<4x8xf32, #tpu.memory_space<smem>>
    %360 = vector.extract_strided_slice %1 {offsets = [3, 0], sizes = [1, 256], strides = [1, 1]} : vector<4x256xf32> to vector<1x256xf32>
    %361 = vector.broadcast %359 : f32 to vector<1x256xf32>
    %362 = arith.mulf %361, %360 : vector<1x256xf32>
    %363 = arith.addf %358, %362 : vector<1x256xf32>
    %c0_140 = arith.constant 0 : index
    %c7_141 = arith.constant 7 : index
    %364 = memref.load %arg5[%c0_140, %c7_141] : memref<4x8xf32, #tpu.memory_space<smem>>
    %365 = vector.extract_strided_slice %3 {offsets = [0, 0], sizes = [1, 256], strides = [1, 1]} : vector<4x256xf32> to vector<1x256xf32>
    %366 = vector.broadcast %364 : f32 to vector<1x256xf32>
    %367 = arith.mulf %366, %365 : vector<1x256xf32>
    %368 = arith.addf %363, %367 : vector<1x256xf32>
    %c1_142 = arith.constant 1 : index
    %c7_143 = arith.constant 7 : index
    %369 = memref.load %arg5[%c1_142, %c7_143] : memref<4x8xf32, #tpu.memory_space<smem>>
    %370 = vector.extract_strided_slice %3 {offsets = [1, 0], sizes = [1, 256], strides = [1, 1]} : vector<4x256xf32> to vector<1x256xf32>
    %371 = vector.broadcast %369 : f32 to vector<1x256xf32>
    %372 = arith.mulf %371, %370 : vector<1x256xf32>
    %373 = arith.addf %368, %372 : vector<1x256xf32>
    %c2_144 = arith.constant 2 : index
    %c7_145 = arith.constant 7 : index
    %374 = memref.load %arg5[%c2_144, %c7_145] : memref<4x8xf32, #tpu.memory_space<smem>>
    %375 = vector.extract_strided_slice %3 {offsets = [2, 0], sizes = [1, 256], strides = [1, 1]} : vector<4x256xf32> to vector<1x256xf32>
    %376 = vector.broadcast %374 : f32 to vector<1x256xf32>
    %377 = arith.mulf %376, %375 : vector<1x256xf32>
    %378 = arith.addf %373, %377 : vector<1x256xf32>
    %c3_146 = arith.constant 3 : index
    %c7_147 = arith.constant 7 : index
    %379 = memref.load %arg5[%c3_146, %c7_147] : memref<4x8xf32, #tpu.memory_space<smem>>
    %380 = vector.extract_strided_slice %3 {offsets = [3, 0], sizes = [1, 256], strides = [1, 1]} : vector<4x256xf32> to vector<1x256xf32>
    %381 = vector.broadcast %379 : f32 to vector<1x256xf32>
    %382 = arith.mulf %381, %380 : vector<1x256xf32>
    %383 = arith.addf %378, %382 : vector<1x256xf32>
    %cst_148 = arith.constant 0.000000e+00 : f32
    %384 = vector.broadcast %cst_148 : f32 to vector<1x256xf32>
    %385 = arith.maximumf %383, %384 : vector<1x256xf32>
    %c7_149 = arith.constant 7 : index
    %386 = memref.load %arg7[%c7_149] : memref<8xf32, #tpu.memory_space<smem>>
    %387 = vector.broadcast %386 : f32 to vector<1x256xf32>
    %388 = arith.mulf %387, %385 : vector<1x256xf32>
    %389 = arith.addf %341, %388 : vector<1x256xf32>
    %390 = arith.negf %389 : vector<1x256xf32>
    %391 = math.exp %390 : vector<1x256xf32>
    %cst_150 = arith.constant 1.000000e+00 : f32
    %392 = vector.broadcast %cst_150 : f32 to vector<1x256xf32>
    %393 = arith.addf %392, %391 : vector<1x256xf32>
    %394 = arith.divf %392, %393 : vector<1x256xf32>
    %395 = vector.broadcast %394 : vector<1x256xf32> to vector<4x256xf32>
    %396 = arith.mulf %3, %395 : vector<4x256xf32>
    %c0_151 = arith.constant 0 : index
    %c0_152 = arith.constant 0 : index
    %c0_153 = arith.constant 0 : index
    %397 = vector.load %arg9[%c0_151, %c0_152, %c0_153] : memref<1x4x256xf32, #tpu.memory_space<vmem>>, vector<1x4x256xf32>
    %398 = vector.shape_cast %397 : vector<1x4x256xf32> to vector<4x256xf32>
    %399 = vector.shape_cast %396 : vector<4x256xf32> to vector<1x4x256xf32>
    tpu.vector_store %arg9[%c0_151, %c0_152, %c0_153], %399 {strides = array<i32>} : memref<1x4x256xf32, #tpu.memory_space<vmem>>, vector<1x4x256xf32>,
    return
  }
  func.func @transform_0(%arg0: i32, %arg1: i32) -> (i32, i32, i32) {
    %c0_i32 = arith.constant 0 : i32
    %c0_i32_0 = arith.constant 0 : i32
    return %arg0, %c0_i32, %arg1 : i32, i32, i32
  }
  func.func @transform_1(%arg0: i32, %arg1: i32) -> (i32, i32, i32) {
    %c0_i32 = arith.constant 0 : i32
    %c0_i32_0 = arith.constant 0 : i32
    return %arg0, %c0_i32, %arg1 : i32, i32, i32
  }
  func.func @transform_2(%arg0: i32, %arg1: i32) -> (i32, i32) {
    %c0_i32 = arith.constant 0 : i32
    %c0_i32_0 = arith.constant 0 : i32
    %c0_i32_1 = arith.constant 0 : i32
    return %c0_i32, %c0_i32_0 : i32, i32
  }
  func.func @transform_3(%arg0: i32, %arg1: i32) -> (i32, i32) {
    %c0_i32 = arith.constant 0 : i32
    %c0_i32_0 = arith.constant 0 : i32
    %c0_i32_1 = arith.constant 0 : i32
    return %c0_i32, %c0_i32_0 : i32, i32
  }
  func.func @transform_4(%arg0: i32, %arg1: i32) -> i32 {
    %c0_i32 = arith.constant 0 : i32
    %c0_i32_0 = arith.constant 0 : i32
    return %c0_i32 : i32
  }
  func.func @transform_5(%arg0: i32, %arg1: i32) -> i32 {
    %c0_i32 = arith.constant 0 : i32
    %c0_i32_0 = arith.constant 0 : i32
    return %c0_i32 : i32
  }
  func.func @transform_6(%arg0: i32, %arg1: i32) -> i32 {
    %c0_i32 = arith.constant 0 : i32
    %c0_i32_0 = arith.constant 0 : i32
    return %c0_i32 : i32
  }
  func.func @transform_7(%arg0: i32, %arg1: i32) -> (i32, i32, i32) {
    %c0_i32 = arith.constant 0 : i32
    %c0_i32_0 = arith.constant 0 : i32
    return %arg0, %c0_i32, %arg1 : i32, i32, i32
  }
}

</mosaic_0001>

<llo_original>
// kernel: tpu_custom_call.1
$region0: #{tpu_custom_call.1}
  #allocation0 [shape = 'u32[]', space=smem, size = 0x4, offset = 0x4, fixed_abs, tag = 'smem constant byte address 0x4 - core index']
  #allocation1 [shape = 'u32[144,128]{1,0:T(1,128)}', space=vmem, size = 0x12000, scoped, tag = 'internal scratch']
  #allocation2 [shape = 'f32[1]{0:T(128)S(6)}', space=smem, size = 0x200, scoped, tag = 'scoped memory for tpu_custom_call.1']
  %s0 = inlined_call_operand.hbm [shape: f32[2,4,256], index: 0, kind: input, shape index: {}]
  %s1 = inlined_call_operand.hbm [shape: f32[2,4,256], index: 1, kind: input, shape index: {}]
  %s2 = inlined_call_operand.vmem [shape: f32[4,8], index: 2, kind: input, shape index: {}]
  %s3 = inlined_call_operand.hbm [shape: f32[4,8], index: 3, kind: input, shape index: {}]
  %s4 = inlined_call_operand.vmem [shape: f32[8], index: 4, kind: input, shape index: {}]
  %s5 = inlined_call_operand.vmem [shape: f32[8], index: 5, kind: input, shape index: {}]
  %s6 = inlined_call_operand.<no memory space> [shape: f32[1], index: 6, kind: input, shape index: {}]
  %s7 = inlined_call_operand.hbm [shape: f32[2,4,256], index: 7, kind: output, shape index: {}]
  %s8 = sld [smem:[#allocation0]]
  $region85: #{tpu_custom_call.1} parent=0
    _
  %s10 = ssub.s32 1, %s8
  %s11 = scalar_select 0, %s10, %s8
  %12 = sst [smem:[#allocation2]] %s6
  $region1: #{tpu_custom_call.1} parent=0
    #allocation3 [shape = 'u8[8192]{0}', space=vmem, size = 0x2000, scoped, tag = 'input window, operand 0']
    #allocation4 [shape = 's32[2]{0}', space=sflag, size = 0x8, scoped, tag = 'scoped memory for tpu_custom_call.1']
    #allocation5 [shape = 's32[2]{0}', space=sflag, size = 0x8, scoped, tag = 'scoped memory for tpu_custom_call.1']
    #allocation6 [shape = 's32[2]{0}', space=sflag, size = 0x8, scoped, tag = 'scoped memory for tpu_custom_call.1']
    #allocation7 [shape = 's32[2]{0}', space=sflag, size = 0x8, scoped, tag = 'scoped memory for tpu_custom_call.1']
    #allocation8 [shape = 'u8[8192]{0}', space=vmem, size = 0x2000, scoped, tag = 'input window, operand 1']
    #allocation9 [shape = 's32[2]{0}', space=sflag, size = 0x8, scoped, tag = 'scoped memory for tpu_custom_call.1']
    #allocation10 [shape = 'u8[2048]{0}', space=smem, size = 0x800, scoped, tag = 'input window, operand 2, single buffered']
    #allocation11 [shape = 'u8[2048]{0}', space=smem, size = 0x800, scoped, tag = 'input window, operand 3, single buffered']
    #allocation12 [shape = 'u8[512]{0}', space=smem, size = 0x200, scoped, tag = 'input window, operand 4, single buffered']
    #allocation13 [shape = 's32[1]{0}', space=sflag, size = 0x4, scoped, tag = 'scoped memory for tpu_custom_call.1']
    #allocation14 [shape = 'u8[512]{0}', space=smem, size = 0x200, scoped, tag = 'input window, operand 5, single buffered']
    #allocation15 [shape = 'u8[8192]{0}', space=vmem, size = 0x2000, scoped, tag = 'output window, operand 0']
    %13 = vsyncpa [#allocation4], 0
    %s14 = scalar_lea.sflag [#allocation4], 1
    %15 = vsyncpa %s14, 0
    %16 = vsyncpa [#allocation9], 0
    %s17 = scalar_lea.sflag [#allocation9], 1
    %18 = vsyncpa %s17, 0
    %19 = vsyncpa [#allocation7], 0
    %20 = vsyncpa [#allocation6], 0
    %21 = vsyncpa [#allocation13], 0
    %22 = vsyncpa [#allocation5], 0
    %s23 = scalar_lea.sflag [#allocation5], 1
    %24 = vsyncpa %s23, 0
    loop: start=0, step=1, limit=4
    $region2: #{tpu_custom_call.1} parent=1 // loop_pre_header
      _
    $region3: #{tpu_custom_call.1} parent=1 // loop_header
      %s26 = sphi 0, %s30
      %p27 = scmp.ge.s32.totalorder %s26, 4
      %s33 = sphi 0, %s45
      %s34 = sphi 0, %s41
      %s35 = sphi 0, %s33
      %s36 = sphi 0, %s34
      %s37 = sphi 0, %s35
      %s38 = sphi 0, %s36
      %s50 = sphi 0, %s52
      %s53 = sphi 0, %s50
      %s54 = sphi 0, %s53
      %s70 = sphi 0, %s54
      %s78 = sphi 0, %s80
      %s81 = sphi 0, %s78
      %s82 = sphi 0, %s81
      %s98 = sphi 0, %s82
      %s102 = sphi 0, %s102
      %s104 = sphi 0, %s102
      %s105 = sphi 0, %s104
      %s119 = sphi 0, %s105
      %s123 = sphi 0, %s123
      %s125 = sphi 0, %s123
      %s126 = sphi 0, %s125
      %s140 = sphi 0, %s126
      %s144 = sphi 0, %s144
      %s146 = sphi 0, %s144
      %s147 = sphi 0, %s146
      %s161 = sphi 0, %s147
      %s165 = sphi 0, %s165
      %s167 = sphi 0, %s165
      %s168 = sphi 0, %s167
      %s182 = sphi 0, %s168
      %s186 = sphi 0, %s186
      %s188 = sphi 0, %s186
      %s189 = sphi 0, %s188
      %s203 = sphi 0, %s189
      %s211 = sphi 0, %s213
      %s214 = sphi 0, %s211
      %s215 = sphi 0, %s214
      %s231 = sphi 0, %s215
    $region4: #{tpu_custom_call.1} parent=1 // loop_header_branch
      %29 = sbr.rel (%p27) target = $region8
    $region5: #{tpu_custom_call.1} parent=1 // loop_body
      %s31 = ssub.s32 %s26, 1
      %s32 = ssub.s32 %s26, 2
      %s39 = sadd.s32 1, %s34
      %p40 = scmp.ge.s32.totalorder %s39, 1
      %s41 = scalar_select %p40, 0, %s39
      %s42 = sadd.s32 1, %s33
      %s43 = scalar_select %p40, %s42, %s33
      %p44 = scmp.ge.s32.totalorder %s43, 2
      %s45 = scalar_select %p44, 0, %s43
      %s46 = ssub.s32 %s33, %s45
      %s47 = ssub.s32 %s34, %s41
      %s48 = sor.u32 %s46, %s47
      %p49 = scmp.eq.s32.totalorder %s48, 0
      %s51 = sadd.s32 %s50, 1
      %s52 = scalar_select %p49, %s50, %s51
      %p55 = pneg %p49
      %p56 = scmp.eq.s32.totalorder %s26, 1
      %p57 = por %p55, %p56
      %p58 = scmp.ne.s32.totalorder %s50, %s53
      %p59 = scmp.eq.s32.totalorder %s26, 0
      %p60 = por %p58, %p59
      %p61 = scmp.ne.s32.totalorder %s50, %s53
      %p62 = scmp.eq.s32.totalorder %s31, 1
      %p63 = por %p61, %p62
      %p64 = scmp.ne.s32.totalorder %s53, %s54
      %p65 = scmp.eq.s32.totalorder %s31, 0
      %p66 = por %p64, %p65
      %p67 = scmp.ne.s32.totalorder %s53, %s54
      %p68 = scmp.eq.s32.totalorder %s32, 1
      %p69 = por %p67, %p68
      %p71 = scmp.ne.s32.totalorder %s54, %s70
      %p72 = scmp.eq.s32.totalorder %s32, 0
      %p73 = por %p71, %p72
      %s74 = ssub.s32 %s33, %s45
      %s75 = ssub.s32 %s34, %s41
      %s76 = sor.u32 %s74, %s75
      %p77 = scmp.eq.s32.totalorder %s76, 0
      %s79 = sadd.s32 %s78, 1
      %s80 = scalar_select %p77, %s78, %s79
      %p83 = pneg %p77
      %p84 = scmp.eq.s32.totalorder %s26, 1
      %p85 = por %p83, %p84
      %p86 = scmp.ne.s32.totalorder %s78, %s81
      %p87 = scmp.eq.s32.totalorder %s26, 0
      %p88 = por %p86, %p87
      %p89 = scmp.ne.s32.totalorder %s78, %s81
      %p90 = scmp.eq.s32.totalorder %s31, 1
      %p91 = por %p89, %p90
      %p92 = scmp.ne.s32.totalorder %s81, %s82
      %p93 = scmp.eq.s32.totalorder %s31, 0
      %p94 = por %p92, %p93
      %p95 = scmp.ne.s32.totalorder %s81, %s82
      %p96 = scmp.eq.s32.totalorder %s32, 1
      %p97 = por %p95, %p96
      %p99 = scmp.ne.s32.totalorder %s82, %s98
      %p100 = scmp.eq.s32.totalorder %s32, 0
      %p101 = por %p99, %p100
      %s103 = sadd.s32 %s102, 1
      %p106 = scmp.eq.s32.totalorder %s26, 1
      %p107 = scmp.ne.s32.totalorder %s102, %s104
      %p108 = scmp.eq.s32.totalorder %s26, 0
      %p109 = por %p107, %p108
      %p110 = scmp.ne.s32.totalorder %s102, %s104
      %p111 = scmp.eq.s32.totalorder %s31, 1
      %p112 = por %p110, %p111
      %p113 = scmp.ne.s32.totalorder %s104, %s105
      %p114 = scmp.eq.s32.totalorder %s31, 0
      %p115 = por %p113, %p114
      %p116 = scmp.ne.s32.totalorder %s104, %s105
      %p117 = scmp.eq.s32.totalorder %s32, 1
      %p118 = por %p116, %p117
      %p120 = scmp.ne.s32.totalorder %s105, %s119
      %p121 = scmp.eq.s32.totalorder %s32, 0
      %p122 = por %p120, %p121
      %s124 = sadd.s32 %s123, 1
      %p127 = scmp.eq.s32.totalorder %s26, 1
      %p128 = scmp.ne.s32.totalorder %s123, %s125
      %p129 = scmp.eq.s32.totalorder %s26, 0
      %p130 = por %p128, %p129
      %p131 = scmp.ne.s32.totalorder %s123, %s125
      %p132 = scmp.eq.s32.totalorder %s31, 1
      %p133 = por %p131, %p132
      %p134 = scmp.ne.s32.totalorder %s125, %s126
      %p135 = scmp.eq.s32.totalorder %s31, 0
      %p136 = por %p134, %p135
      %p137 = scmp.ne.s32.totalorder %s125, %s126
      %p138 = scmp.eq.s32.totalorder %s32, 1
      %p139 = por %p137, %p138
      %p141 = scmp.ne.s32.totalorder %s126, %s140
      %p142 = scmp.eq.s32.totalorder %s32, 0
      %p143 = por %p141, %p142
      %s145 = sadd.s32 %s144, 1
      %p148 = scmp.eq.s32.totalorder %s26, 1
      %p149 = scmp.ne.s32.totalorder %s144, %s146
      %p150 = scmp.eq.s32.totalorder %s26, 0
      %p151 = por %p149, %p150
      %p152 = scmp.ne.s32.totalorder %s144, %s146
      %p153 = scmp.eq.s32.totalorder %s31, 1
      %p154 = por %p152, %p153
      %p155 = scmp.ne.s32.totalorder %s146, %s147
      %p156 = scmp.eq.s32.totalorder %s31, 0
      %p157 = por %p155, %p156
      %p158 = scmp.ne.s32.totalorder %s146, %s147
      %p159 = scmp.eq.s32.totalorder %s32, 1
      %p160 = por %p158, %p159
      %p162 = scmp.ne.s32.totalorder %s147, %s161
      %p163 = scmp.eq.s32.totalorder %s32, 0
      %p164 = por %p162, %p163
      %s166 = sadd.s32 %s165, 1
      %p169 = scmp.eq.s32.totalorder %s26, 1
      %p170 = scmp.ne.s32.totalorder %s165, %s167
      %p171 = scmp.eq.s32.totalorder %s26, 0
      %p172 = por %p170, %p171
      %p173 = scmp.ne.s32.totalorder %s165, %s167
      %p174 = scmp.eq.s32.totalorder %s31, 1
      %p175 = por %p173, %p174
      %p176 = scmp.ne.s32.totalorder %s167, %s168
      %p177 = scmp.eq.s32.totalorder %s31, 0
      %p178 = por %p176, %p177
      %p179 = scmp.ne.s32.totalorder %s167, %s168
      %p180 = scmp.eq.s32.totalorder %s32, 1
      %p181 = por %p179, %p180
      %p183 = scmp.ne.s32.totalorder %s168, %s182
      %p184 = scmp.eq.s32.totalorder %s32, 0
      %p185 = por %p183, %p184
      %s187 = sadd.s32 %s186, 1
      %p190 = scmp.eq.s32.totalorder %s26, 1
      %p191 = scmp.ne.s32.totalorder %s186, %s188
      %p192 = scmp.eq.s32.totalorder %s26, 0
      %p193 = por %p191, %p192
      %p194 = scmp.ne.s32.totalorder %s186, %s188
      %p195 = scmp.eq.s32.totalorder %s31, 1
      %p196 = por %p194, %p195
      %p197 = scmp.ne.s32.totalorder %s188, %s189
      %p198 = scmp.eq.s32.totalorder %s31, 0
      %p199 = por %p197, %p198
      %p200 = scmp.ne.s32.totalorder %s188, %s189
      %p201 = scmp.eq.s32.totalorder %s32, 1
      %p202 = por %p200, %p201
      %p204 = scmp.ne.s32.totalorder %s189, %s203
      %p205 = scmp.eq.s32.totalorder %s32, 0
      %p206 = por %p204, %p205
      %s207 = ssub.s32 %s33, %s45
      %s208 = ssub.s32 %s34, %s41
      %s209 = sor.u32 %s207, %s208
      %p210 = scmp.eq.s32.totalorder %s209, 0
      %s212 = sadd.s32 %s211, 1
      %s213 = scalar_select %p210, %s211, %s212
      %p216 = pneg %p210
      %p217 = scmp.eq.s32.totalorder %s26, 1
      %p218 = por %p216, %p217
      %p219 = scmp.ne.s32.totalorder %s211, %s214
      %p220 = scmp.eq.s32.totalorder %s26, 0
      %p221 = por %p219, %p220
      %p222 = scmp.ne.s32.totalorder %s211, %s214
      %p223 = scmp.eq.s32.totalorder %s31, 1
      %p224 = por %p222, %p223
      %p225 = scmp.ne.s32.totalorder %s214, %s215
      %p226 = scmp.eq.s32.totalorder %s31, 0
      %p227 = por %p225, %p226
      %p228 = scmp.ne.s32.totalorder %s214, %s215
      %p229 = scmp.eq.s32.totalorder %s32, 1
      %p230 = por %p228, %p229
      %p232 = scmp.ne.s32.totalorder %s215, %s231
      %p233 = scmp.eq.s32.totalorder %s32, 0
      %p234 = por %p232, %p233
      %p235 = scmp.le.s32.totalorder 1, %s26
      %p236 = scmp.lt.s32.totalorder %s26, 3
      %p237 = pnand %p235, %p236
      %p238 = pneg %p237
      // Predicated region
      $region9: #{tpu_custom_call.1} parent=5 // pred_check
        _
      $region10: #{tpu_custom_call.1} parent=5 // pred_check_branch
        %240 = sbr.rel (%p237) target = $region12
      $region11: #{tpu_custom_call.1} parent=5 // pred_region
        %s241 = ssub.s32 %s26, 1
        // Predicated region
        $region13: #{tpu_custom_call.1} parent=11 // pred_check
          %p242 = pneg %p115
        $region14: #{tpu_custom_call.1} parent=11 // pred_check_branch
          %244 = sbr.rel (%p242) target = $region16
        $region15: #{tpu_custom_call.1} parent=11 // pred_region
          %s246 = ssub.s32 64, 64
          %247 = vsyncadd [#allocation7], %s246
          %s249 = sshll.u32 %s2, 4
          %s250 = int_to_ptr.vmem [resolvable:$true] %s249
          %252 = dma.vmem_to_smem %s250, 64, [#allocation10], [#allocation7]
        $region16: #{tpu_custom_call.1} parent=11 // pred_fallthru
          _
        // Predicated region
        $region17: #{tpu_custom_call.1} parent=11 // pred_check
          %p253 = pneg %p136
        $region18: #{tpu_custom_call.1} parent=11 // pred_check_branch
          %255 = sbr.rel (%p253) target = $region20
        $region19: #{tpu_custom_call.1} parent=11 // pred_region
          %s257 = ssub.s32 64, 64
          %258 = vsyncadd [#allocation6], %s257
          %261 = dma.hbm_to_smem %s3, 64, [#allocation11], [#allocation6]
        $region20: #{tpu_custom_call.1} parent=11 // pred_fallthru
          _
        // Predicated region
        $region21: #{tpu_custom_call.1} parent=11 // pred_check
          %p262 = pneg %p157
        $region22: #{tpu_custom_call.1} parent=11 // pred_check_branch
          %264 = sbr.rel (%p262) target = $region24
        $region23: #{tpu_custom_call.1} parent=11 // pred_region
          %s266 = ssub.s32 16, 16
          %267 = vsyncadd [#allocation13], %s266
          %s269 = sshll.u32 %s4, 4
          %s270 = int_to_ptr.vmem [resolvable:$true] %s269
          %272 = dma.vmem_to_smem %s270, 16, [#allocation12], [#allocation13]
        $region24: #{tpu_custom_call.1} parent=11 // pred_fallthru
          _
        // Predicated region
        $region25: #{tpu_custom_call.1} parent=11 // pred_check
          %p273 = pneg %p178
        $region26: #{tpu_custom_call.1} parent=11 // pred_check_branch
          %275 = sbr.rel (%p273) target = $region28
        $region27: #{tpu_custom_call.1} parent=11 // pred_region
          %s277 = ssub.s32 16, 16
          %278 = vsyncadd [#allocation13], %s277
          %s280 = sshll.u32 %s5, 4
          %s281 = int_to_ptr.vmem [resolvable:$true] %s280
          %283 = dma.vmem_to_smem %s281, 16, [#allocation14], [#allocation13]
        $region28: #{tpu_custom_call.1} parent=11 // pred_fallthru
          _
        // Predicated region
        $region29: #{tpu_custom_call.1} parent=11 // pred_check
          %p284 = pneg %p199
        $region30: #{tpu_custom_call.1} parent=11 // pred_check_branch
          %286 = sbr.rel (%p284) target = $region32
        $region31: #{tpu_custom_call.1} parent=11 // pred_region
          _
        $region32: #{tpu_custom_call.1} parent=11 // pred_fallthru
          _
      $region12: #{tpu_custom_call.1} parent=5 // pred_fallthru
        _
      %p287 = scmp.lt.s32.totalorder %s26, 2
      // Predicated region
      $region33: #{tpu_custom_call.1} parent=5 // pred_check
        %p288 = pneg %p287
      $region34: #{tpu_custom_call.1} parent=5 // pred_check_branch
        %290 = sbr.rel (%p288) target = $region36
      $region35: #{tpu_custom_call.1} parent=5 // pred_region
        // Predicated region
        $region37: #{tpu_custom_call.1} parent=35 // pred_check
          %p291 = pneg %p60
        $region38: #{tpu_custom_call.1} parent=35 // pred_check_branch
          %293 = sbr.rel (%p291) target = $region40
        $region39: #{tpu_custom_call.1} parent=35 // pred_region
          %s294 = sand.u32 %s50, 1
          %s295 = scalar_lea.sflag [#allocation4], %s294
          %s296 = sand.u32 %s50, 1
          %s297 = smul.addr %s296, 8
          %s298 = scalar_lea.vmem [#allocation3], %s297
          %s299 = smul.u32 2, %s34
          %s301 = ssub.s32 128, 128
          %302 = vsyncadd %s295, %s301
          %s303 = smul.addr %s33, 2
          %s304 = sadd.s32 %s299, %s303
          %s305 = smul.addr %s304, 64
          %s306 = scalar_lea.hbm %s0, %s305
          %s308 = sshll.u32 %s298, 4
          %s309 = int_to_ptr.vmem [resolvable:$true] %s308
          %311 = dma.hbm_to_vmem [thread:$0]  %s306, 128, %s309, %s295
        $region40: #{tpu_custom_call.1} parent=35 // pred_fallthru
          _
        // Predicated region
        $region41: #{tpu_custom_call.1} parent=35 // pred_check
          %p312 = pneg %p88
        $region42: #{tpu_custom_call.1} parent=35 // pred_check_branch
          %314 = sbr.rel (%p312) target = $region44
        $region43: #{tpu_custom_call.1} parent=35 // pred_region
          %s315 = sand.u32 %s78, 1
          %s316 = scalar_lea.sflag [#allocation9], %s315
          %s317 = sand.u32 %s78, 1
          %s318 = smul.addr %s317, 8
          %s319 = scalar_lea.vmem [#allocation8], %s318
          %s320 = smul.u32 2, %s34
          %s322 = ssub.s32 128, 128
          %323 = vsyncadd %s316, %s322
          %s324 = smul.addr %s33, 2
          %s325 = sadd.s32 %s320, %s324
          %s326 = smul.addr %s325, 64
          %s327 = scalar_lea.hbm %s1, %s326
          %s329 = sshll.u32 %s319, 4
          %s330 = int_to_ptr.vmem [resolvable:$true] %s329
          %332 = dma.hbm_to_vmem [thread:$0]  %s327, 128, %s330, %s316
        $region44: #{tpu_custom_call.1} parent=35 // pred_fallthru
          _
      $region36: #{tpu_custom_call.1} parent=5 // pred_fallthru
        _
      %p333 = scmp.le.s32.totalorder 1, %s26
      %p334 = scmp.lt.s32.totalorder %s26, 3
      %p335 = pnand %p333, %p334
      %p336 = pneg %p335
      // Predicated region
      $region45: #{tpu_custom_call.1} parent=5 // pred_check
        _
      $region46: #{tpu_custom_call.1} parent=5 // pred_check_branch
        %338 = sbr.rel (%p335) target = $region48
      $region47: #{tpu_custom_call.1} parent=5 // pred_region
        %s339 = ssub.s32 %s26, 1
        %s340 = sand.u32 %s53, 1
        %s341 = scalar_lea.sflag [#allocation4], %s340
        %s342 = sand.u32 %s53, 1
        %s343 = smul.addr %s342, 8
        %s344 = scalar_lea.vmem [#allocation3], %s343
        // Predicated region
        $region49: #{tpu_custom_call.1} parent=47 // pred_check
          %p345 = pneg %p66
        $region50: #{tpu_custom_call.1} parent=47 // pred_check_branch
          %347 = sbr.rel (%p345) target = $region52
        $region51: #{tpu_custom_call.1} parent=47 // pred_region
          %348 = dma.done %s341, 128
        $region52: #{tpu_custom_call.1} parent=47 // pred_fallthru
          _
        %s349 = sand.u32 %s81, 1
        %s350 = scalar_lea.sflag [#allocation9], %s349
        %s351 = sand.u32 %s81, 1
        %s352 = smul.addr %s351, 8
        %s353 = scalar_lea.vmem [#allocation8], %s352
        // Predicated region
        $region53: #{tpu_custom_call.1} parent=47 // pred_check
          %p354 = pneg %p94
        $region54: #{tpu_custom_call.1} parent=47 // pred_check_branch
          %356 = sbr.rel (%p354) target = $region56
        $region55: #{tpu_custom_call.1} parent=47 // pred_region
          %357 = dma.done %s350, 128
        $region56: #{tpu_custom_call.1} parent=47 // pred_fallthru
          _
        // Predicated region
        $region57: #{tpu_custom_call.1} parent=47 // pred_check
          %p358 = pneg %p115
        $region58: #{tpu_custom_call.1} parent=47 // pred_check_branch
          %360 = sbr.rel (%p358) target = $region60
        $region59: #{tpu_custom_call.1} parent=47 // pred_region
          %361 = dma.done [#allocation7], 64
        $region60: #{tpu_custom_call.1} parent=47 // pred_fallthru
          _
        // Predicated region
        $region61: #{tpu_custom_call.1} parent=47 // pred_check
          %p362 = pneg %p136
        $region62: #{tpu_custom_call.1} parent=47 // pred_check_branch
          %364 = sbr.rel (%p362) target = $region64
        $region63: #{tpu_custom_call.1} parent=47 // pred_region
          %365 = dma.done [#allocation6], 64
        $region64: #{tpu_custom_call.1} parent=47 // pred_fallthru
          _
        // Predicated region
        $region65: #{tpu_custom_call.1} parent=47 // pred_check
          %p366 = pneg %p157
        $region66: #{tpu_custom_call.1} parent=47 // pred_check_branch
          %368 = sbr.rel (%p366) target = $region68
        $region67: #{tpu_custom_call.1} parent=47 // pred_region
          %369 = dma.done [#allocation13], 16
        $region68: #{tpu_custom_call.1} parent=47 // pred_fallthru
          _
        // Predicated region
        $region69: #{tpu_custom_call.1} parent=47 // pred_check
          %p370 = pneg %p178
        $region70: #{tpu_custom_call.1} parent=47 // pred_check_branch
          %372 = sbr.rel (%p370) target = $region72
        $region71: #{tpu_custom_call.1} parent=47 // pred_region
          %373 = dma.done [#allocation13], 16
        $region72: #{tpu_custom_call.1} parent=47 // pred_fallthru
          _
        %374 = sfence
        %s375 = sand.u32 %s53, 1
        %s376 = scalar_lea.sflag [#allocation4], %s375
        %s377 = sand.u32 %s53, 1
        %s378 = smul.addr %s377, 8
        %s379 = scalar_lea.vmem [#allocation3], %s378
        %p380 = pneg %p66
        %p381 = pneg %p63
        %s382 = sand.u32 %s81, 1
        %s383 = scalar_lea.sflag [#allocation9], %s382
        %s384 = sand.u32 %s81, 1
        %s385 = smul.addr %s384, 8
        %s386 = scalar_lea.vmem [#allocation8], %s385
        %p387 = pneg %p94
        %p388 = pneg %p91
        %p389 = pneg %p115
        %p390 = pneg %p112
        %p391 = pneg %p136
        %p392 = pneg %p133
        %p393 = pneg %p157
        %p394 = pneg %p154
        %p395 = pneg %p178
        %p396 = pneg %p175
        %p397 = pneg %p199
        %p398 = pneg %p196
        %p399 = pneg %p227
        %p400 = pneg %p224
        %s401 = sand.u32 %s214, 1
        %s402 = scalar_lea.sflag [#allocation5], %s401
        %s403 = sand.u32 %s214, 1
        %s404 = smul.addr %s403, 8
        %s405 = scalar_lea.vmem [#allocation15], %s404
        %s406 = smul.u32 2, %s36
        %s407 = smul.u32 2, %s36
        %s408 = smul.u32 2, %s36
        %v409 = vld [vmem:[%s344] sm:$0xff]
        %v410 = vld [vmem:[%s353] sm:$0xff]
        %s411 = sld [smem:[#allocation2]]
        %v412 = vstv %s411
        %s413 = sld [smem:[#allocation12]]
        %v414 = vstv %s413
        %s415 = sld [smem:[#allocation10]]
        %v416 = vstv %s415
        %v417 = vmul.f32 %v416, %v409
        %v418 = vadd.f32 %v414, %v417
        %s419 = sld [smem:[#allocation10 + $0x80]]
        %v420 = vstv %s419
        %v421 = vmul.f32 %v420, %v409
        %v423 = vrot.slane %v421, 5
        %v424 = vrot.slane %v423, 4
        %v426 = vadd.f32 %v418, %v424
        %s427 = sld [smem:[#allocation10 + $0x100]]
        %v428 = vstv %s427
        %v429 = vmul.f32 %v428, %v409
        %v431 = vrot.slane %v429, 6
        %v432 = vrot.slane %v431, 4
        %v434 = vadd.f32 %v426, %v432
        %s435 = sld [smem:[#allocation10 + $0x180]]
        %v436 = vstv %s435
        %v437 = vmul.f32 %v436, %v409
        %v439 = vrot.slane %v437, 7
        %v440 = vrot.slane %v439, 4
        %v442 = vadd.f32 %v434, %v440
        %s443 = sld [smem:[#allocation11]]
        %v444 = vstv %s443
        %v445 = vmul.f32 %v444, %v410
        %v446 = vadd.f32 %v442, %v445
        %s447 = sld [smem:[#allocation11 + $0x80]]
        %v448 = vstv %s447
        %v449 = vmul.f32 %v448, %v410
        %v451 = vrot.slane %v449, 5
        %v452 = vrot.slane %v451, 4
        %v454 = vadd.f32 %v446, %v452
        %s455 = sld [smem:[#allocation11 + $0x100]]
        %v456 = vstv %s455
        %v457 = vmul.f32 %v456, %v410
        %v459 = vrot.slane %v457, 6
        %v460 = vrot.slane %v459, 4
        %v462 = vadd.f32 %v454, %v460
        %s463 = sld [smem:[#allocation11 + $0x180]]
        %v464 = vstv %s463
        %v465 = vmul.f32 %v464, %v410
        %v467 = vrot.slane %v465, 7
        %v468 = vrot.slane %v467, 4
        %v470 = vadd.f32 %v462, %v468
        %v471 = vmax.f32 %v470, 0.0
        %s472 = sld [smem:[#allocation14]]
        %v473 = vstv %s472
        %v474 = vmul.f32 %v473, %v471
        %v475 = vadd.f32 %v412, %v474
        %s476 = sld [smem:[#allocation12 + $0x1]]
        %v477 = vstv %s476
        %s478 = sld [smem:[#allocation10 + $0x1]]
        %v479 = vstv %s478
        %v480 = vmul.f32 %v479, %v409
        %v481 = vadd.f32 %v477, %v480
        %s482 = sld [smem:[#allocation10 + $0x81]]
        %v483 = vstv %s482
        %v484 = vmul.f32 %v483, %v409
        %v486 = vrot.slane %v484, 5
        %v487 = vrot.slane %v486, 4
        %v489 = vadd.f32 %v481, %v487
        %s490 = sld [smem:[#allocation10 + $0x101]]
        %v491 = vstv %s490
        %v492 = vmul.f32 %v491, %v409
        %v494 = vrot.slane %v492, 6
        %v495 = vrot.slane %v494, 4
        %v497 = vadd.f32 %v489, %v495
        %s498 = sld [smem:[#allocation10 + $0x181]]
        %v499 = vstv %s498
        %v500 = vmul.f32 %v499, %v409
        %v502 = vrot.slane %v500, 7
        %v503 = vrot.slane %v502, 4
        %v505 = vadd.f32 %v497, %v503
        %s506 = sld [smem:[#allocation11 + $0x1]]
        %v507 = vstv %s506
        %v508 = vmul.f32 %v507, %v410
        %v509 = vadd.f32 %v505, %v508
        %s510 = sld [smem:[#allocation11 + $0x81]]
        %v511 = vstv %s510
        %v512 = vmul.f32 %v511, %v410
        %v514 = vrot.slane %v512, 5
        %v515 = vrot.slane %v514, 4
        %v517 = vadd.f32 %v509, %v515
        %s518 = sld [smem:[#allocation11 + $0x101]]
        %v519 = vstv %s518
        %v520 = vmul.f32 %v519, %v410
        %v522 = vrot.slane %v520, 6
        %v523 = vrot.slane %v522, 4
        %v525 = vadd.f32 %v517, %v523
        %s526 = sld [smem:[#allocation11 + $0x181]]
        %v527 = vstv %s526
        %v528 = vmul.f32 %v527, %v410
        %v530 = vrot.slane %v528, 7
        %v531 = vrot.slane %v530, 4
        %v533 = vadd.f32 %v525, %v531
        %v534 = vmax.f32 %v533, 0.0
        %s535 = sld [smem:[#allocation14 + $0x1]]
        %v536 = vstv %s535
        %v537 = vmul.f32 %v536, %v534
        %v538 = vadd.f32 %v475, %v537
        %s539 = sld [smem:[#allocation12 + $0x2]]
        %v540 = vstv %s539
        %s541 = sld [smem:[#allocation10 + $0x2]]
        %v542 = vstv %s541
        %v543 = vmul.f32 %v542, %v409
        %v544 = vadd.f32 %v540, %v543
        %s545 = sld [smem:[#allocation10 + $0x82]]
        %v546 = vstv %s545
        %v547 = vmul.f32 %v546, %v409
        %v549 = vrot.slane %v547, 5
        %v550 = vrot.slane %v549, 4
        %v552 = vadd.f32 %v544, %v550
        %s553 = sld [smem:[#allocation10 + $0x102]]
        %v554 = vstv %s553
        %v555 = vmul.f32 %v554, %v409
        %v557 = vrot.slane %v555, 6
        %v558 = vrot.slane %v557, 4
        %v560 = vadd.f32 %v552, %v558
        %s561 = sld [smem:[#allocation10 + $0x182]]
        %v562 = vstv %s561
        %v563 = vmul.f32 %v562, %v409
        %v565 = vrot.slane %v563, 7
        %v566 = vrot.slane %v565, 4
        %v568 = vadd.f32 %v560, %v566
        %s569 = sld [smem:[#allocation11 + $0x2]]
        %v570 = vstv %s569
        %v571 = vmul.f32 %v570, %v410
        %v572 = vadd.f32 %v568, %v571
        %s573 = sld [smem:[#allocation11 + $0x82]]
        %v574 = vstv %s573
        %v575 = vmul.f32 %v574, %v410
        %v577 = vrot.slane %v575, 5
        %v578 = vrot.slane %v577, 4
        %v580 = vadd.f32 %v572, %v578
        %s581 = sld [smem:[#allocation11 + $0x102]]
        %v582 = vstv %s581
        %v583 = vmul.f32 %v582, %v410
        %v585 = vrot.slane %v583, 6
        %v586 = vrot.slane %v585, 4
        %v588 = vadd.f32 %v580, %v586
        %s589 = sld [smem:[#allocation11 + $0x182]]
        %v590 = vstv %s589
        %v591 = vmul.f32 %v590, %v410
        %v593 = vrot.slane %v591, 7
        %v594 = vrot.slane %v593, 4
        %v596 = vadd.f32 %v588, %v594
        %v597 = vmax.f32 %v596, 0.0
        %s598 = sld [smem:[#allocation14 + $0x2]]
        %v599 = vstv %s598
        %v600 = vmul.f32 %v599, %v597
        %v601 = vadd.f32 %v538, %v600
        %s602 = sld [smem:[#allocation12 + $0x3]]
        %v603 = vstv %s602
        %s604 = sld [smem:[#allocation10 + $0x3]]
        %v605 = vstv %s604
        %v606 = vmul.f32 %v605, %v409
        %v607 = vadd.f32 %v603, %v606
        %s608 = sld [smem:[#allocation10 + $0x83]]
        %v609 = vstv %s608
        %v610 = vmul.f32 %v609, %v409
        %v612 = vrot.slane %v610, 5
        %v613 = vrot.slane %v612, 4
        %v615 = vadd.f32 %v607, %v613
        %s616 = sld [smem:[#allocation10 + $0x103]]
        %v617 = vstv %s616
        %v618 = vmul.f32 %v617, %v409
        %v620 = vrot.slane %v618, 6
        %v621 = vrot.slane %v620, 4
        %v623 = vadd.f32 %v615, %v621
        %s624 = sld [smem:[#allocation10 + $0x183]]
        %v625 = vstv %s624
        %v626 = vmul.f32 %v625, %v409
        %v628 = vrot.slane %v626, 7
        %v629 = vrot.slane %v628, 4
        %v631 = vadd.f32 %v623, %v629
        %s632 = sld [smem:[#allocation11 + $0x3]]
        %v633 = vstv %s632
        %v634 = vmul.f32 %v633, %v410
        %v635 = vadd.f32 %v631, %v634
        %s636 = sld [smem:[#allocation11 + $0x83]]
        %v637 = vstv %s636
        %v638 = vmul.f32 %v637, %v410
        %v640 = vrot.slane %v638, 5
        %v641 = vrot.slane %v640, 4
        %v643 = vadd.f32 %v635, %v641
        %s644 = sld [smem:[#allocation11 + $0x103]]
        %v645 = vstv %s644
        %v646 = vmul.f32 %v645, %v410
        %v648 = vrot.slane %v646, 6
        %v649 = vrot.slane %v648, 4
        %v651 = vadd.f32 %v643, %v649
        %s652 = sld [smem:[#allocation11 + $0x183]]
        %v653 = vstv %s652
        %v654 = vmul.f32 %v653, %v410
        %v656 = vrot.slane %v654, 7
        %v657 = vrot.slane %v656, 4
        %v659 = vadd.f32 %v651, %v657
        %v660 = vmax.f32 %v659, 0.0
        %s661 = sld [smem:[#allocation14 + $0x3]]
        %v662 = vstv %s661
        %v663 = vmul.f32 %v662, %v660
        %v664 = vadd.f32 %v601, %v663
        %s665 = sld [smem:[#allocation12 + $0x4]]
        %v666 = vstv %s665
        %s667 = sld [smem:[#allocation10 + $0x4]]
        %v668 = vstv %s667
        %v669 = vmul.f32 %v668, %v409
        %v670 = vadd.f32 %v666, %v669
        %s671 = sld [smem:[#allocation10 + $0x84]]
        %v672 = vstv %s671
        %v673 = vmul.f32 %v672, %v409
        %v675 = vrot.slane %v673, 5
        %v676 = vrot.slane %v675, 4
        %v678 = vadd.f32 %v670, %v676
        %s679 = sld [smem:[#allocation10 + $0x104]]
        %v680 = vstv %s679
        %v681 = vmul.f32 %v680, %v409
        %v683 = vrot.slane %v681, 6
        %v684 = vrot.slane %v683, 4
        %v686 = vadd.f32 %v678, %v684
        %s687 = sld [smem:[#allocation10 + $0x184]]
        %v688 = vstv %s687
        %v689 = vmul.f32 %v688, %v409
        %v691 = vrot.slane %v689, 7
        %v692 = vrot.slane %v691, 4
        %v694 = vadd.f32 %v686, %v692
        %s695 = sld [smem:[#allocation11 + $0x4]]
        %v696 = vstv %s695
        %v697 = vmul.f32 %v696, %v410
        %v698 = vadd.f32 %v694, %v697
        %s699 = sld [smem:[#allocation11 + $0x84]]
        %v700 = vstv %s699
        %v701 = vmul.f32 %v700, %v410
        %v703 = vrot.slane %v701, 5
        %v704 = vrot.slane %v703, 4
        %v706 = vadd.f32 %v698, %v704
        %s707 = sld [smem:[#allocation11 + $0x104]]
        %v708 = vstv %s707
        %v709 = vmul.f32 %v708, %v410
        %v711 = vrot.slane %v709, 6
        %v712 = vrot.slane %v711, 4
        %v714 = vadd.f32 %v706, %v712
        %s715 = sld [smem:[#allocation11 + $0x184]]
        %v716 = vstv %s715
        %v717 = vmul.f32 %v716, %v410
        %v719 = vrot.slane %v717, 7
        %v720 = vrot.slane %v719, 4
        %v722 = vadd.f32 %v714, %v720
        %v723 = vmax.f32 %v722, 0.0
        %s724 = sld [smem:[#allocation14 + $0x4]]
        %v725 = vstv %s724
        %v726 = vmul.f32 %v725, %v723
        %v727 = vadd.f32 %v664, %v726
        %s728 = sld [smem:[#allocation12 + $0x5]]
        %v729 = vstv %s728
        %s730 = sld [smem:[#allocation10 + $0x5]]
        %v731 = vstv %s730
        %v732 = vmul.f32 %v731, %v409
        %v733 = vadd.f32 %v729, %v732
        %s734 = sld [smem:[#allocation10 + $0x85]]
        %v735 = vstv %s734
        %v736 = vmul.f32 %v735, %v409
        %v738 = vrot.slane %v736, 5
        %v739 = vrot.slane %v738, 4
        %v741 = vadd.f32 %v733, %v739
        %s742 = sld [smem:[#allocation10 + $0x105]]
        %v743 = vstv %s742
        %v744 = vmul.f32 %v743, %v409
        %v746 = vrot.slane %v744, 6
        %v747 = vrot.slane %v746, 4
        %v749 = vadd.f32 %v741, %v747
        %s750 = sld [smem:[#allocation10 + $0x185]]
        %v751 = vstv %s750
        %v752 = vmul.f32 %v751, %v409
        %v754 = vrot.slane %v752, 7
        %v755 = vrot.slane %v754, 4
        %v757 = vadd.f32 %v749, %v755
        %s758 = sld [smem:[#allocation11 + $0x5]]
        %v759 = vstv %s758
        %v760 = vmul.f32 %v759, %v410
        %v761 = vadd.f32 %v757, %v760
        %s762 = sld [smem:[#allocation11 + $0x85]]
        %v763 = vstv %s762
        %v764 = vmul.f32 %v763, %v410
        %v766 = vrot.slane %v764, 5
        %v767 = vrot.slane %v766, 4
        %v769 = vadd.f32 %v761, %v767
        %s770 = sld [smem:[#allocation11 + $0x105]]
        %v771 = vstv %s770
        %v772 = vmul.f32 %v771, %v410
        %v774 = vrot.slane %v772, 6
        %v775 = vrot.slane %v774, 4
        %v777 = vadd.f32 %v769, %v775
        %s778 = sld [smem:[#allocation11 + $0x185]]
        %v779 = vstv %s778
        %v780 = vmul.f32 %v779, %v410
        %v782 = vrot.slane %v780, 7
        %v783 = vrot.slane %v782, 4
        %v785 = vadd.f32 %v777, %v783
        %v786 = vmax.f32 %v785, 0.0
        %s787 = sld [smem:[#allocation14 + $0x5]]
        %v788 = vstv %s787
        %v789 = vmul.f32 %v788, %v786
        %v790 = vadd.f32 %v727, %v789
        %s791 = sld [smem:[#allocation12 + $0x6]]
        %v792 = vstv %s791
        %s793 = sld [smem:[#allocation10 + $0x6]]
        %v794 = vstv %s793
        %v795 = vmul.f32 %v794, %v409
        %v796 = vadd.f32 %v792, %v795
        %s797 = sld [smem:[#allocation10 + $0x86]]
        %v798 = vstv %s797
        %v799 = vmul.f32 %v798, %v409
        %v801 = vrot.slane %v799, 5
        %v802 = vrot.slane %v801, 4
        %v804 = vadd.f32 %v796, %v802
        %s805 = sld [smem:[#allocation10 + $0x106]]
        %v806 = vstv %s805
        %v807 = vmul.f32 %v806, %v409
        %v809 = vrot.slane %v807, 6
        %v810 = vrot.slane %v809, 4
        %v812 = vadd.f32 %v804, %v810
        %s813 = sld [smem:[#allocation10 + $0x186]]
        %v814 = vstv %s813
        %v815 = vmul.f32 %v814, %v409
        %v817 = vrot.slane %v815, 7
        %v818 = vrot.slane %v817, 4
        %v820 = vadd.f32 %v812, %v818
        %s821 = sld [smem:[#allocation11 + $0x6]]
        %v822 = vstv %s821
        %v823 = vmul.f32 %v822, %v410
        %v824 = vadd.f32 %v820, %v823
        %s825 = sld [smem:[#allocation11 + $0x86]]
        %v826 = vstv %s825
        %v827 = vmul.f32 %v826, %v410
        %v829 = vrot.slane %v827, 5
        %v830 = vrot.slane %v829, 4
        %v832 = vadd.f32 %v824, %v830
        %s833 = sld [smem:[#allocation11 + $0x106]]
        %v834 = vstv %s833
        %v835 = vmul.f32 %v834, %v410
        %v837 = vrot.slane %v835, 6
        %v838 = vrot.slane %v837, 4
        %v840 = vadd.f32 %v832, %v838
        %s841 = sld [smem:[#allocation11 + $0x186]]
        %v842 = vstv %s841
        %v843 = vmul.f32 %v842, %v410
        %v845 = vrot.slane %v843, 7
        %v846 = vrot.slane %v845, 4
        %v848 = vadd.f32 %v840, %v846
        %v849 = vmax.f32 %v848, 0.0
        %s850 = sld [smem:[#allocation14 + $0x6]]
        %v851 = vstv %s850
        %v852 = vmul.f32 %v851, %v849
        %v853 = vadd.f32 %v790, %v852
        %s854 = sld [smem:[#allocation12 + $0x7]]
        %v855 = vstv %s854
        %s856 = sld [smem:[#allocation10 + $0x7]]
        %v857 = vstv %s856
        %v858 = vmul.f32 %v857, %v409
        %v859 = vadd.f32 %v855, %v858
        %s860 = sld [smem:[#allocation10 + $0x87]]
        %v861 = vstv %s860
        %v862 = vmul.f32 %v861, %v409
        %v864 = vrot.slane %v862, 5
        %v865 = vrot.slane %v864, 4
        %v867 = vadd.f32 %v859, %v865
        %s868 = sld [smem:[#allocation10 + $0x107]]
        %v869 = vstv %s868
        %v870 = vmul.f32 %v869, %v409
        %v872 = vrot.slane %v870, 6
        %v873 = vrot.slane %v872, 4
        %v875 = vadd.f32 %v867, %v873
        %s876 = sld [smem:[#allocation10 + $0x187]]
        %v877 = vstv %s876
        %v878 = vmul.f32 %v877, %v409
        %v880 = vrot.slane %v878, 7
        %v881 = vrot.slane %v880, 4
        %v883 = vadd.f32 %v875, %v881
        %s884 = sld [smem:[#allocation11 + $0x7]]
        %v885 = vstv %s884
        %v886 = vmul.f32 %v885, %v410
        %v887 = vadd.f32 %v883, %v886
        %s888 = sld [smem:[#allocation11 + $0x87]]
        %v889 = vstv %s888
        %v890 = vmul.f32 %v889, %v410
        %v892 = vrot.slane %v890, 5
        %v893 = vrot.slane %v892, 4
        %v895 = vadd.f32 %v887, %v893
        %s896 = sld [smem:[#allocation11 + $0x107]]
        %v897 = vstv %s896
        %v898 = vmul.f32 %v897, %v410
        %v900 = vrot.slane %v898, 6
        %v901 = vrot.slane %v900, 4
        %v903 = vadd.f32 %v895, %v901
        %s904 = sld [smem:[#allocation11 + $0x187]]
        %v905 = vstv %s904
        %v906 = vmul.f32 %v905, %v410
        %v908 = vrot.slane %v906, 7
        %v909 = vrot.slane %v908, 4
        %v911 = vadd.f32 %v903, %v909
        %v912 = vmax.f32 %v911, 0.0
        %s913 = sld [smem:[#allocation14 + $0x7]]
        %v914 = vstv %s913
        %v915 = vmul.f32 %v914, %v912
        %v916 = vadd.f32 %v853, %v915
        %v917 = vxor.u32 %v916, 2147483648
        %v918 = vmul.f32 %v917, 1.442695
        %v919 = vpow.pop %v918
        %v920 = vadd.f32 %v919, 1.0
        %v921 = vrcp.pop %v920
        %v922 = vmul.f32 1.0, %v921
        %v924 = vlaneseq
        %v925 = vshrl.u32 %v924, 7
        %v926 = vsub.s32 0, %v925
        %v927 = vrot.slane %v922, %v926
        %v928 = vlaneseq
        %v929 = vshrl.u32 %v928, 7
        %v930 = vsub.s32 4, %v929
        %v931 = vrot.slane %v922, %v930
        %v934 = vlaneseq
        %v935 = vshrl.u32 %v934, 7
        %v936 = vsub.s32 0, %v935
        %v937 = vrot.slane %v927, %v936
        %v938 = vlaneseq
        %v939 = vshrl.u32 %v938, 7
        %v940 = vsub.s32 0, %v939
        %v941 = vrot.slane %v931, %v940
        %v944 = vcombine.low %v937, %v941
        %v946 = vmul.f32 %v410, %v944
        %947 = vst [vmem:[%s405] sm:$0xff] %v946
        %s948 = sand.u32 %s214, 1
        %s949 = scalar_lea.sflag [#allocation5], %s948
        %s950 = sand.u32 %s214, 1
        %s951 = smul.addr %s950, 8
        %s952 = scalar_lea.vmem [#allocation15], %s951
        // Predicated region
        $region73: #{tpu_custom_call.1} parent=47 // pred_check
          %p953 = pneg %p224
        $region74: #{tpu_custom_call.1} parent=47 // pred_check_branch
          %955 = sbr.rel (%p953) target = $region76
        $region75: #{tpu_custom_call.1} parent=47 // pred_region
          %s956 = smul.u32 2, %s36
          %s958 = ssub.s32 128, 128
          %959 = vsyncadd %s949, %s958
          %s960 = smul.addr %s35, 2
          %s961 = sadd.s32 %s956, %s960
          %s962 = smul.addr %s961, 64
          %s963 = scalar_lea.hbm %s7, %s962
          %s965 = sshll.u32 %s952, 4
          %s966 = int_to_ptr.vmem [resolvable:$true] %s965
          %968 = dma.vmem_to_hbm [thread:$0]  %s966, 128, %s963, %s949
        $region76: #{tpu_custom_call.1} parent=47 // pred_fallthru
          _
      $region48: #{tpu_custom_call.1} parent=5 // pred_fallthru
        _
      %p969 = scmp.le.s32.totalorder 2, %s26
      // Predicated region
      $region77: #{tpu_custom_call.1} parent=5 // pred_check
        %p970 = pneg %p969
      $region78: #{tpu_custom_call.1} parent=5 // pred_check_branch
        %972 = sbr.rel (%p970) target = $region80
      $region79: #{tpu_custom_call.1} parent=5 // pred_region
        %s973 = ssub.s32 %s26, 2
        // Predicated region
        $region81: #{tpu_custom_call.1} parent=79 // pred_check
          %p974 = pneg %p230
        $region82: #{tpu_custom_call.1} parent=79 // pred_check_branch
          %976 = sbr.rel (%p974) target = $region84
        $region83: #{tpu_custom_call.1} parent=79 // pred_region
          %s977 = sand.u32 %s215, 1
          %s978 = scalar_lea.sflag [#allocation5], %s977
          %s979 = sand.u32 %s215, 1
          %s980 = smul.addr %s979, 8
          %s981 = scalar_lea.vmem [#allocation15], %s980
          %982 = dma.done %s978, 128
        $region84: #{tpu_custom_call.1} parent=79 // pred_fallthru
          _
      $region80: #{tpu_custom_call.1} parent=5 // pred_fallthru
        _
    $region6: #{tpu_custom_call.1} parent=1 // loop_footer
      %s30 = sadd.s32 1, %s26
    $region7: #{tpu_custom_call.1} parent=1 // loop_footer_branch
      %25 = sbr.rel target = $region3
    $region8: #{tpu_custom_call.1} parent=1 // loop_exit
      _
    %983 = vsyncpa [#allocation4], 1
    %s984 = scalar_lea.sflag [#allocation4], 1
    %985 = vsyncpa %s984, 1
    %986 = vsyncpa [#allocation9], 1
    %s987 = scalar_lea.sflag [#allocation9], 1
    %988 = vsyncpa %s987, 1
    %989 = vsyncpa [#allocation5], 1
    %s990 = scalar_lea.sflag [#allocation5], 1
    %991 = vsyncpa %s990, 1
    %992 = vsyncpa [#allocation6], 1
    %s993 = scalar_lea.sflag [#allocation6], 1
    %994 = vsyncpa %s993, 1
    %995 = vsyncpa [#allocation7], 1
    %s996 = scalar_lea.sflag [#allocation7], 1
    %997 = vsyncpa %s996, 1
    %998 = vsyncpa [#allocation13], 1

</llo_original>
